<compile_context>
chip_gen: v5e
topology: v5e:2x2
jax: 0.10.0
libtpu: 0.0.40
codegen_flags: <defaults>
</compile_context>

<pallas_src>
import jax
import jax.numpy as jnp
from jax.experimental import pallas as pl
from jax.experimental.pallas import tpu as pltpu


EMB_DIM = 128        # embedding_dim
HID_DIM = 256        # hidden_dim
HID2 = HID_DIM // 2  # 128
CONTENT_DIM = 4


def _round_up(x, m):
    return (x + m - 1) // m * m


def _recommender_kernel(
    # scalar-prefetch refs (SMEM)
    uid_ref, iid_ref,
    # inputs
    cf_ref,                        # (TILE_B, 4) f32 VMEM tile
    utbl_ref, itbl_ref,            # (num_users, E) / (num_items, E) f32, HBM (pl.ANY)
    wc1_ref, bc1_ref,              # content layer 1: (4, H) f32, (1, H) f32   (VPU path)
    wc2_ref, bc2_ref,              # content layer 2: (H, E) bf16, (1, E) f32
    wp1ui_ref, wp1c_ref, bp1_ref,  # pred layer 1: (2E, H) bf16, (E, H) bf16, (1, H) f32
    wp2_ref, bp2_ref,              # pred layer 2: (H, H/2) bf16, (1, H/2) f32
    wp3_ref, bp3_ref,              # pred layer 3 as a row: (1, H/2) f32, (1, 1) f32
    # outputs
    out_ref,                       # (TILE_B, 1) f32
    # scratch
    ui_buf,                        # (TILE_B, 2E) f32 gather target [user | item]
    gsem,                          # (2,) DMA semaphores (0: user rows, 1: item rows)
):
    tile_b = cf_ref.shape[0]
    base = pl.program_id(0) * tile_b

    # ---- 1) kick off the embedding-row gather DMAs for this tile ------------------
    @pl.loop(0, tile_b)
    def _start(r):
        u_row = uid_ref[base + r]
        i_row = iid_ref[base + r]
        pltpu.make_async_copy(
            utbl_ref.at[pl.ds(u_row, 1), :],
            ui_buf.at[pl.ds(r, 1), pl.ds(0, EMB_DIM)],
            gsem.at[0]).start()
        pltpu.make_async_copy(
            itbl_ref.at[pl.ds(i_row, 1), :],
            ui_buf.at[pl.ds(r, 1), pl.ds(EMB_DIM, EMB_DIM)],
            gsem.at[1]).start()

    # ---- 2) content MLP while the gather DMAs are in flight -----------------------
    # Linear(4, H): K=4 is MXU-hostile -> 4 VPU broadcast-FMAs instead of a matmul.
    cf = cf_ref[...]
    wc1 = wc1_ref[...]
    h = (cf[:, 0:1] * wc1[0:1, :] + cf[:, 1:2] * wc1[1:2, :]
         + cf[:, 2:3] * wc1[2:3, :] + cf[:, 3:4] * wc1[3:4, :]
         + bc1_ref[...])
    h = jnp.maximum(h, 0.0)                      # ReLU (Dropout: inference no-op)
    cemb = jnp.dot(h.astype(jnp.bfloat16), wc2_ref[...],
                   preferred_element_type=jnp.float32) + bc2_ref[...]

    # ---- 3) wait for all gathered rows (same-size dummy descriptors) --------------
    @pl.loop(0, tile_b)
    def _wait(r):
        pltpu.make_async_copy(
            utbl_ref.at[pl.ds(0, 1), :],
            ui_buf.at[pl.ds(0, 1), pl.ds(0, EMB_DIM)],
            gsem.at[0]).wait()
        pltpu.make_async_copy(
            itbl_ref.at[pl.ds(0, 1), :],
            ui_buf.at[pl.ds(0, 1), pl.ds(EMB_DIM, EMB_DIM)],
            gsem.at[1]).wait()

    # ---- 4) prediction MLP ---------------------------------------------------------
    # layer 1 on concat([user, item, cemb]): [user|item] already packed along lanes ->
    # a single K=256 matmul plus one K=128 matmul for the content embedding.
    ui = ui_buf[...].astype(jnp.bfloat16)
    h1 = (jnp.dot(ui, wp1ui_ref[...], preferred_element_type=jnp.float32)
          + jnp.dot(cemb.astype(jnp.bfloat16), wp1c_ref[...],
                    preferred_element_type=jnp.float32)
          + bp1_ref[...])
    h1 = jnp.maximum(h1, 0.0)

    h2 = jnp.dot(h1.astype(jnp.bfloat16), wp2_ref[...],
                 preferred_element_type=jnp.float32) + bp2_ref[...]
    h2 = jnp.maximum(h2, 0.0)

    # layer 3: Linear(H/2, 1) as VPU multiply + XLU lane reduction (skip the N=1 MXU pass).
    logit = jnp.sum(h2 * wp3_ref[...], axis=-1, keepdims=True) + bp3_ref[...]
    out_ref[...] = jax.nn.sigmoid(logit) * 4.0 + 1.0


def hybrid_recommender_forward(user_ids, item_ids, content_features, params, tile_b=None):
    """Pallas forward pass.  Returns shape (B,) predictions in [1, 5]."""
    p = params
    B = int(user_ids.shape[0])
    if tile_b is None:
        tile_b = min(512, _round_up(B, 8))       # big tiles amortize the ~0.35 us/step cost
    tile_b = max(8, _round_up(int(tile_b), 8))
    b_pad = _round_up(B, tile_b)
    num_tiles = b_pad // tile_b

    # Validate/clamp ids (VMEM-side accesses are not bounds-checked), pad to tile multiple.
    num_users = p["user_embedding"].shape[0]
    num_items = p["item_embedding"].shape[0]
    uid = jnp.pad(jnp.clip(user_ids.astype(jnp.int32), 0, num_users - 1), (0, b_pad - B))
    iid = jnp.pad(jnp.clip(item_ids.astype(jnp.int32), 0, num_items - 1), (0, b_pad - B))
    cf = jnp.pad(content_features.astype(jnp.float32), ((0, b_pad - B), (0, 0)))

    weights = (p["wc1"], p["bc1"], p["wc2"], p["bc2"],
               p["wp1ui"], p["wp1c"], p["bp1"],
               p["wp2"], p["bp2"], p["wp3"], p["bp3"])

    def tile_map(i, uid_ref, iid_ref):
        return (i, 0)

    def const_map(i, uid_ref, iid_ref):
        return (0, 0)

    in_specs = (
        [pl.BlockSpec((tile_b, CONTENT_DIM), tile_map),     # content-feature tile
         pl.BlockSpec(memory_space=pl.ANY),                 # user embedding table (HBM)
         pl.BlockSpec(memory_space=pl.ANY)]                 # item embedding table (HBM)
        + [pl.BlockSpec(w.shape, const_map) for w in weights]   # resident weights/biases
    )

    grid_spec = pltpu.PrefetchScalarGridSpec(
        num_scalar_prefetch=2,                  # user_ids, item_ids -> SMEM
        grid=(num_tiles,),
        in_specs=in_specs,
        out_specs=pl.BlockSpec((tile_b, 1), tile_map),
        scratch_shapes=[
            pltpu.VMEM((tile_b, 2 * EMB_DIM), jnp.float32),   # [user | item] gather buffer
            pltpu.SemaphoreType.DMA((2,)),
        ],
    )

    flops = 2 * b_pad * (CONTENT_DIM * HID_DIM + HID_DIM * EMB_DIM
                         + 2 * EMB_DIM * HID_DIM + EMB_DIM * HID_DIM
                         + HID_DIM * HID2 + HID2)
    bytes_accessed = (2 * b_pad * EMB_DIM * 4               # gathered embedding rows (f32)
                      + b_pad * CONTENT_DIM * 4 + b_pad * 4
                      + sum(int(w.size) * w.dtype.itemsize for w in weights))

    out = pl.pallas_call(
        _recommender_kernel,
        grid_spec=grid_spec,
        out_shape=jax.ShapeDtypeStruct((b_pad, 1), jnp.float32),
        compiler_params=pltpu.CompilerParams(
            dimension_semantics=("parallel",),   # shard batch tiles across TCs (v7x megacore)
            vmem_limit_bytes=32 * 1024 * 1024),
        cost_estimate=pl.CostEstimate(flops=int(flops), transcendentals=int(b_pad),
                                      bytes_accessed=int(bytes_accessed)),
    )(uid, iid, cf, p["user_embedding"], p["item_embedding"], *weights)

    return out[:B, 0]   # matches torch .squeeze() for B > 1


def init_params(key, num_users, num_items, emb_dim=EMB_DIM, hid_dim=HID_DIM):
    ks = jax.random.split(key, 8)

    def lin(k, fan_in, fan_out):
        kw, kb = jax.random.split(k)
        bound = 1.0 / jnp.sqrt(fan_in)
        w = jax.random.uniform(kw, (fan_in, fan_out), jnp.float32, -bound, bound)
        b = jax.random.uniform(kb, (1, fan_out), jnp.float32, -bound, bound)
        return w, b

    p = {}
    # nn.Embedding weights ~ N(0, 0.1); kept f32 so per-row gather DMAs stay 32-bit aligned.
    p["user_embedding"] = 0.1 * jax.random.normal(ks[0], (num_users, emb_dim), jnp.float32)
    p["item_embedding"] = 0.1 * jax.random.normal(ks[1], (num_items, emb_dim), jnp.float32)
    # content_mlp: Linear(4, H) (VPU layer, f32) -> ReLU -> Dropout -> Linear(H, E) (MXU, bf16)
    p["wc1"], p["bc1"] = lin(ks[2], CONTENT_DIM, hid_dim)
    wc2, p["bc2"] = lin(ks[3], hid_dim, emb_dim)
    p["wc2"] = wc2.astype(jnp.bfloat16)
    # prediction_mlp layer 1: (3E, H) split into the fused [user|item] block and the cemb block
    w1, p["bp1"] = lin(ks[4], 3 * emb_dim, hid_dim)
    p["wp1ui"] = w1[:2 * emb_dim].astype(jnp.bfloat16)
    p["wp1c"] = w1[2 * emb_dim:].astype(jnp.bfloat16)
    # layer 2 and layer 3 (layer-3 weight stored as a (1, H/2) row for the VPU reduction path)
    wp2, p["bp2"] = lin(ks[5], hid_dim, hid_dim // 2)
    p["wp2"] = wp2.astype(jnp.bfloat16)
    wp3, p["bp3"] = lin(ks[6], hid_dim // 2, 1)
    p["wp3"] = wp3.reshape(1, hid_dim // 2)     # f32
    return p


def reference_forward_policy(user_ids, item_ids, cf, p):
    """Pure-JAX mirror of the kernel's exact dtype policy (bf16 MXU inputs, f32 accumulation)."""
    bf16, f32 = jnp.bfloat16, jnp.float32
    u = jnp.take(p["user_embedding"], user_ids, axis=0)
    it = jnp.take(p["item_embedding"], item_ids, axis=0)
    ui = jnp.concatenate([u, it], axis=1).astype(bf16)
    wc1 = p["wc1"]
    h = (cf[:, 0:1] * wc1[0:1] + cf[:, 1:2] * wc1[1:2]
         + cf[:, 2:3] * wc1[2:3] + cf[:, 3:4] * wc1[3:4] + p["bc1"])
    h = jnp.maximum(h, 0.0)
    cemb = jnp.dot(h.astype(bf16), p["wc2"], preferred_element_type=f32) + p["bc2"]
    h1 = (jnp.dot(ui, p["wp1ui"], preferred_element_type=f32)
          + jnp.dot(cemb.astype(bf16), p["wp1c"], preferred_element_type=f32) + p["bp1"])
    h1 = jnp.maximum(h1, 0.0)
    h2 = jnp.dot(h1.astype(bf16), p["wp2"], preferred_element_type=f32) + p["bp2"]
    h2 = jnp.maximum(h2, 0.0)
    logit = jnp.sum(h2 * p["wp3"], axis=-1, keepdims=True) + p["bp3"]
    return (jax.nn.sigmoid(logit) * 4.0 + 1.0)[:, 0]


def reference_forward_f32(user_ids, item_ids, cf, p):
    """Pure-f32 restatement of HybridRecommenderModel.forward (eval mode)."""
    f32 = jnp.float32
    u = jnp.take(p["user_embedding"].astype(f32), user_ids, axis=0)
    it = jnp.take(p["item_embedding"].astype(f32), item_ids, axis=0)
    h = jax.nn.relu(cf @ p["wc1"] + p["bc1"])
    cemb = h @ p["wc2"].astype(f32) + p["bc2"]
    combined = jnp.concatenate([u, it, cemb], axis=1)
    w1 = jnp.concatenate([p["wp1ui"], p["wp1c"]], axis=0).astype(f32)
    h1 = jax.nn.relu(combined @ w1 + p["bp1"])
    h2 = jax.nn.relu(h1 @ p["wp2"].astype(f32) + p["bp2"])
    logit = h2 @ p["wp3"].astype(f32).T + p["bp3"]
    return (jax.nn.sigmoid(logit) * 4.0 + 1.0)[:, 0]


if __name__ == "__main__":
    key = jax.random.PRNGKey(0)
    kp, ku, ki, kc = jax.random.split(key, 4)

    NUM_USERS, NUM_ITEMS, BATCH = 100, 50, 22   # BATCH deliberately not a tile multiple
    params = init_params(kp, NUM_USERS, NUM_ITEMS)

    user_ids = jax.random.randint(ku, (BATCH,), 0, NUM_USERS)
    item_ids = jax.random.randint(ki, (BATCH,), 0, NUM_ITEMS)
    content_features = jax.random.normal(kc, (BATCH, CONTENT_DIM), jnp.float32)

    # tile_b=8 exercises the multi-tile pipelined grid + padding path at this tiny batch.
    out = hybrid_recommender_forward(user_ids, item_ids, content_features, params, tile_b=8)
    out = jax.block_until_ready(out)
    assert out.shape == (BATCH,)

    ref_policy = reference_forward_policy(user_ids, item_ids, content_features, params)
    ref_f32 = reference_forward_f32(user_ids, item_ids, content_features, params)
    assert jnp.allclose(out, ref_policy, atol=5e-3, rtol=5e-3), (out, ref_policy)
    assert jnp.allclose(out, ref_f32, atol=1e-1), (out, ref_f32)

    print("KERNEL_OK")
</pallas_src>

<mosaic_0001>
module attributes {stable_mosaic.version = 11 : i64} {
  func.func @_recommender_kernel(%arg0: i32, %arg1: memref<24xi32, #tpu.memory_space<smem>>, %arg2: memref<24xi32, #tpu.memory_space<smem>>, %arg3: memref<8x4xf32, #tpu.memory_space<vmem>>, %arg4: memref<100x128xf32, #tpu.memory_space<any>>, %arg5: memref<50x128xf32, #tpu.memory_space<any>>, %arg6: memref<4x256xf32, #tpu.memory_space<vmem>>, %arg7: memref<1x256xf32, #tpu.memory_space<vmem>>, %arg8: memref<256x128xbf16, #tpu.memory_space<vmem>>, %arg9: memref<1x128xf32, #tpu.memory_space<vmem>>, %arg10: memref<256x256xbf16, #tpu.memory_space<vmem>>, %arg11: memref<128x256xbf16, #tpu.memory_space<vmem>>, %arg12: memref<1x256xf32, #tpu.memory_space<vmem>>, %arg13: memref<256x128xbf16, #tpu.memory_space<vmem>>, %arg14: memref<1x128xf32, #tpu.memory_space<vmem>>, %arg15: memref<1x128xf32, #tpu.memory_space<vmem>>, %arg16: memref<1x1xf32, #tpu.memory_space<vmem>>, %arg17: memref<8x1xf32, #tpu.memory_space<vmem>>, %arg18: memref<8x256xf32, #tpu.memory_space<vmem>>, %arg19: memref<2x!tpu.dma_semaphore, #tpu.memory_space<semaphore_mem>>) attributes {dimension_semantics = [#tpu.dimension_semantics<parallel>], iteration_bounds = array<i64: 3>, scalar_prefetch = 2 : i64, scratch_operands = 2 : i64, tpu.core_type = #tpu.core_type<tc>, window_params = [{transform_indices = @transform_0, window_bounds = array<i64: 8, 4>}, {}, {}, {pipeline_mode = #tpu.pipeline_mode<synchronous>, transform_indices = @transform_3, window_bounds = array<i64: 4, 256>}, {pipeline_mode = #tpu.pipeline_mode<synchronous>, transform_indices = @transform_4, window_bounds = array<i64: 1, 256>}, {pipeline_mode = #tpu.pipeline_mode<synchronous>, transform_indices = @transform_5, window_bounds = array<i64: 256, 128>}, {pipeline_mode = #tpu.pipeline_mode<synchronous>, transform_indices = @transform_6, window_bounds = array<i64: 1, 128>}, {pipeline_mode = #tpu.pipeline_mode<synchronous>, transform_indices = @transform_7, window_bounds = array<i64: 256, 256>}, {pipeline_mode = #tpu.pipeline_mode<synchronous>, transform_indices = @transform_8, window_bounds = array<i64: 128, 256>}, {pipeline_mode = #tpu.pipeline_mode<synchronous>, transform_indices = @transform_9, window_bounds = array<i64: 1, 256>}, {pipeline_mode = #tpu.pipeline_mode<synchronous>, transform_indices = @transform_10, window_bounds = array<i64: 256, 128>}, {pipeline_mode = #tpu.pipeline_mode<synchronous>, transform_indices = @transform_11, window_bounds = array<i64: 1, 128>}, {pipeline_mode = #tpu.pipeline_mode<synchronous>, transform_indices = @transform_12, window_bounds = array<i64: 1, 128>}, {pipeline_mode = #tpu.pipeline_mode<synchronous>, transform_indices = @transform_13, window_bounds = array<i64: 1, 1>}, {transform_indices = @transform_14, window_bounds = array<i64: 8, 1>}]} {
    %c8_i32 = arith.constant 8 : i32
    %0 = arith.muli %arg0, %c8_i32 : i32
    %c0_i32 = arith.constant 0 : i32
    %c8_i32_0 = arith.constant 8 : i32
    %1 = arith.addi %c0_i32, %c8_i32_0 : i32
    %c1_i32 = arith.constant 1 : i32
    scf.for %arg20 = %c0_i32 to %1 step %c1_i32  : i32 {
      %c1_i32_42 = arith.constant 1 : i32
      %78 = arith.muli %arg20, %c1_i32_42 : i32
      %c0_i32_43 = arith.constant 0 : i32
      %79 = arith.addi %c0_i32_43, %78 : i32
      %80 = arith.addi %0, %79 : i32
      %81 = arith.index_cast %80 : i32 to index
      %82 = memref.load %arg1[%81] : memref<24xi32, #tpu.memory_space<smem>>
      %83 = arith.addi %0, %79 : i32
      %84 = arith.index_cast %83 : i32 to index
      %85 = memref.load %arg2[%84] : memref<24xi32, #tpu.memory_space<smem>>
      %c0_i32_44 = arith.constant 0 : i32
      %c0_i32_45 = arith.constant 0 : i32
      %86 = tpu.memref_slice %arg4[%82, %c0_i32_45] : memref<100x128xf32, #tpu.memory_space<any>> -> memref<1x128xf32, #tpu.memory_space<any>>
      %c0_i32_46 = arith.constant 0 : i32
      %87 = tpu.memref_slice %arg18[%79, %c0_i32_46] : memref<8x256xf32, #tpu.memory_space<vmem>> -> memref<1x128xf32, #tpu.memory_space<vmem>>
      %88 = tpu.memref_slice %arg19[%c0_i32_44] : memref<2x!tpu.dma_semaphore, #tpu.memory_space<semaphore_mem>> -> memref<1x!tpu.dma_semaphore, #tpu.memory_space<semaphore_mem>>
      %89 = tpu.memref_squeeze %88 : memref<1x!tpu.dma_semaphore, #tpu.memory_space<semaphore_mem>> -> memref<!tpu.dma_semaphore, #tpu.memory_space<semaphore_mem>>
      tpu.enqueue_dma source(%86 : memref<1x128xf32, #tpu.memory_space<any>>) target(%87 : memref<1x128xf32, #tpu.memory_space<vmem>>) target_semaphore(%89 : memref<!tpu.dma_semaphore, #tpu.memory_space<semaphore_mem>>)
      %c1_i32_47 = arith.constant 1 : i32
      %c0_i32_48 = arith.constant 0 : i32
      %90 = tpu.memref_slice %arg5[%85, %c0_i32_48] : memref<50x128xf32, #tpu.memory_space<any>> -> memref<1x128xf32, #tpu.memory_space<any>>
      %c128_i32 = arith.constant 128 : i32
      %91 = tpu.memref_slice %arg18[%79, %c128_i32] : memref<8x256xf32, #tpu.memory_space<vmem>> -> memref<1x128xf32, #tpu.memory_space<vmem>>
      %92 = tpu.memref_slice %arg19[%c1_i32_47] : memref<2x!tpu.dma_semaphore, #tpu.memory_space<semaphore_mem>> -> memref<1x!tpu.dma_semaphore, #tpu.memory_space<semaphore_mem>>
      %93 = tpu.memref_squeeze %92 : memref<1x!tpu.dma_semaphore, #tpu.memory_space<semaphore_mem>> -> memref<!tpu.dma_semaphore, #tpu.memory_space<semaphore_mem>>
      tpu.enqueue_dma source(%90 : memref<1x128xf32, #tpu.memory_space<any>>) target(%91 : memref<1x128xf32, #tpu.memory_space<vmem>>) target_semaphore(%93 : memref<!tpu.dma_semaphore, #tpu.memory_space<semaphore_mem>>)
    }
    %c8_i32_1 = arith.constant 8 : i32
    %c0 = arith.constant 0 : index
    %c0_2 = arith.constant 0 : index
    %2 = vector.load %arg3[%c0, %c0_2] : memref<8x4xf32, #tpu.memory_space<vmem>>, vector<8x4xf32>
    %c0_3 = arith.constant 0 : index
    %c0_4 = arith.constant 0 : index
    %3 = vector.load %arg6[%c0_3, %c0_4] : memref<4x256xf32, #tpu.memory_space<vmem>>, vector<4x256xf32>
    %4 = vector.extract_strided_slice %2 {offsets = [0, 0], sizes = [8, 1], strides = [1, 1]} : vector<8x4xf32> to vector<8x1xf32>
    %5 = vector.extract_strided_slice %3 {offsets = [0, 0], sizes = [1, 256], strides = [1, 1]} : vector<4x256xf32> to vector<1x256xf32>
    %6 = vector.broadcast %4 : vector<8x1xf32> to vector<8x256xf32>
    %7 = vector.broadcast %5 : vector<1x256xf32> to vector<8x256xf32>
    %8 = arith.mulf %6, %7 : vector<8x256xf32>
    %9 = vector.extract_strided_slice %2 {offsets = [0, 1], sizes = [8, 1], strides = [1, 1]} : vector<8x4xf32> to vector<8x1xf32>
    %10 = vector.extract_strided_slice %3 {offsets = [1, 0], sizes = [1, 256], strides = [1, 1]} : vector<4x256xf32> to vector<1x256xf32>
    %11 = vector.broadcast %9 : vector<8x1xf32> to vector<8x256xf32>
    %12 = vector.broadcast %10 : vector<1x256xf32> to vector<8x256xf32>
    %13 = arith.mulf %11, %12 : vector<8x256xf32>
    %14 = arith.addf %8, %13 : vector<8x256xf32>
    %15 = vector.extract_strided_slice %2 {offsets = [0, 2], sizes = [8, 1], strides = [1, 1]} : vector<8x4xf32> to vector<8x1xf32>
    %16 = vector.extract_strided_slice %3 {offsets = [2, 0], sizes = [1, 256], strides = [1, 1]} : vector<4x256xf32> to vector<1x256xf32>
    %17 = vector.broadcast %15 : vector<8x1xf32> to vector<8x256xf32>
    %18 = vector.broadcast %16 : vector<1x256xf32> to vector<8x256xf32>
    %19 = arith.mulf %17, %18 : vector<8x256xf32>
    %20 = arith.addf %14, %19 : vector<8x256xf32>
    %21 = vector.extract_strided_slice %2 {offsets = [0, 3], sizes = [8, 1], strides = [1, 1]} : vector<8x4xf32> to vector<8x1xf32>
    %22 = vector.extract_strided_slice %3 {offsets = [3, 0], sizes = [1, 256], strides = [1, 1]} : vector<4x256xf32> to vector<1x256xf32>
    %23 = vector.broadcast %21 : vector<8x1xf32> to vector<8x256xf32>
    %24 = vector.broadcast %22 : vector<1x256xf32> to vector<8x256xf32>
    %25 = arith.mulf %23, %24 : vector<8x256xf32>
    %26 = arith.addf %20, %25 : vector<8x256xf32>
    %c0_5 = arith.constant 0 : index
    %c0_6 = arith.constant 0 : index
    %27 = vector.load %arg7[%c0_5, %c0_6] : memref<1x256xf32, #tpu.memory_space<vmem>>, vector<1x256xf32>
    %28 = vector.broadcast %27 : vector<1x256xf32> to vector<8x256xf32>
    %29 = arith.addf %26, %28 : vector<8x256xf32>
    %cst = arith.constant 0.000000e+00 : f32
    %30 = vector.broadcast %cst : f32 to vector<8x256xf32>
    %31 = arith.maximumf %29, %30 : vector<8x256xf32>
    %32 = arith.truncf %31 : vector<8x256xf32> to vector<8x256xbf16>
    %c0_7 = arith.constant 0 : index
    %c0_8 = arith.constant 0 : index
    %33 = vector.load %arg8[%c0_7, %c0_8] : memref<256x128xbf16, #tpu.memory_space<vmem>>, vector<256x128xbf16>
    %cst_9 = arith.constant dense<0.000000e+00> : vector<8x128xf32>
    %34 = tpu.matmul %32, %33, %cst_9 {dimension_numbers = #tpu.dot_dimension_numbers<[1], [0], [0], [1], [0, 0, 1, 1], [], []>} : vector<8x256xbf16>, vector<256x128xbf16>, vector<8x128xf32> -> vector<8x128xf32>
    %c0_10 = arith.constant 0 : index
    %c0_11 = arith.constant 0 : index
    %35 = vector.load %arg9[%c0_10, %c0_11] : memref<1x128xf32, #tpu.memory_space<vmem>>, vector<1x128xf32>
    %36 = vector.broadcast %35 : vector<1x128xf32> to vector<8x128xf32>
    %37 = arith.addf %34, %36 : vector<8x128xf32>
    %c0_i32_12 = arith.constant 0 : i32
    %c8_i32_13 = arith.constant 8 : i32
    %38 = arith.addi %c0_i32_12, %c8_i32_13 : i32
    %c1_i32_14 = arith.constant 1 : i32
    scf.for %arg20 = %c0_i32_12 to %38 step %c1_i32_14  : i32 {
      %c0_i32_42 = arith.constant 0 : i32
      %c0_i32_43 = arith.constant 0 : i32
      %c0_i32_44 = arith.constant 0 : i32
      %78 = tpu.memref_slice %arg4[%c0_i32_43, %c0_i32_44] : memref<100x128xf32, #tpu.memory_space<any>> -> memref<1x128xf32, #tpu.memory_space<any>>
      %c0_i32_45 = arith.constant 0 : i32
      %c0_i32_46 = arith.constant 0 : i32
      %79 = tpu.memref_slice %arg18[%c0_i32_45, %c0_i32_46] : memref<8x256xf32, #tpu.memory_space<vmem>> -> memref<1x128xf32, #tpu.memory_space<vmem>>
      %80 = tpu.memref_slice %arg19[%c0_i32_42] : memref<2x!tpu.dma_semaphore, #tpu.memory_space<semaphore_mem>> -> memref<1x!tpu.dma_semaphore, #tpu.memory_space<semaphore_mem>>
      %81 = tpu.memref_squeeze %80 : memref<1x!tpu.dma_semaphore, #tpu.memory_space<semaphore_mem>> -> memref<!tpu.dma_semaphore, #tpu.memory_space<semaphore_mem>>
      tpu.wait_dma2 semaphore(%81 : memref<!tpu.dma_semaphore, #tpu.memory_space<semaphore_mem>>) src(%78 : memref<1x128xf32, #tpu.memory_space<any>>) dst(%79 : memref<1x128xf32, #tpu.memory_space<vmem>>)
      %c1_i32_47 = arith.constant 1 : i32
      %c0_i32_48 = arith.constant 0 : i32
      %c0_i32_49 = arith.constant 0 : i32
      %82 = tpu.memref_slice %arg5[%c0_i32_48, %c0_i32_49] : memref<50x128xf32, #tpu.memory_space<any>> -> memref<1x128xf32, #tpu.memory_space<any>>
      %c0_i32_50 = arith.constant 0 : i32
      %c128_i32 = arith.constant 128 : i32
      %83 = tpu.memref_slice %arg18[%c0_i32_50, %c128_i32] : memref<8x256xf32, #tpu.memory_space<vmem>> -> memref<1x128xf32, #tpu.memory_space<vmem>>
      %84 = tpu.memref_slice %arg19[%c1_i32_47] : memref<2x!tpu.dma_semaphore, #tpu.memory_space<semaphore_mem>> -> memref<1x!tpu.dma_semaphore, #tpu.memory_space<semaphore_mem>>
      %85 = tpu.memref_squeeze %84 : memref<1x!tpu.dma_semaphore, #tpu.memory_space<semaphore_mem>> -> memref<!tpu.dma_semaphore, #tpu.memory_space<semaphore_mem>>
      tpu.wait_dma2 semaphore(%85 : memref<!tpu.dma_semaphore, #tpu.memory_space<semaphore_mem>>) src(%82 : memref<1x128xf32, #tpu.memory_space<any>>) dst(%83 : memref<1x128xf32, #tpu.memory_space<vmem>>)
    }
    %c0_15 = arith.constant 0 : index
    %c0_16 = arith.constant 0 : index
    %39 = vector.load %arg18[%c0_15, %c0_16] : memref<8x256xf32, #tpu.memory_space<vmem>>, vector<8x256xf32>
    %40 = arith.truncf %39 : vector<8x256xf32> to vector<8x256xbf16>
    %c0_17 = arith.constant 0 : index
    %c0_18 = arith.constant 0 : index
    %41 = vector.load %arg10[%c0_17, %c0_18] : memref<256x256xbf16, #tpu.memory_space<vmem>>, vector<256x256xbf16>
    %cst_19 = arith.constant dense<0.000000e+00> : vector<8x256xf32>
    %42 = tpu.matmul %40, %41, %cst_19 {dimension_numbers = #tpu.dot_dimension_numbers<[1], [0], [0], [1], [0, 0, 1, 1], [], []>} : vector<8x256xbf16>, vector<256x256xbf16>, vector<8x256xf32> -> vector<8x256xf32>
    %43 = arith.truncf %37 : vector<8x128xf32> to vector<8x128xbf16>
    %c0_20 = arith.constant 0 : index
    %c0_21 = arith.constant 0 : index
    %44 = vector.load %arg11[%c0_20, %c0_21] : memref<128x256xbf16, #tpu.memory_space<vmem>>, vector<128x256xbf16>
    %cst_22 = arith.constant dense<0.000000e+00> : vector<8x256xf32>
    %45 = tpu.matmul %43, %44, %cst_22 {dimension_numbers = #tpu.dot_dimension_numbers<[1], [0], [0], [1], [0, 0, 1, 1], [], []>} : vector<8x128xbf16>, vector<128x256xbf16>, vector<8x256xf32> -> vector<8x256xf32>
    %46 = arith.addf %42, %45 : vector<8x256xf32>
    %c0_23 = arith.constant 0 : index
    %c0_24 = arith.constant 0 : index
    %47 = vector.load %arg12[%c0_23, %c0_24] : memref<1x256xf32, #tpu.memory_space<vmem>>, vector<1x256xf32>
    %48 = vector.broadcast %47 : vector<1x256xf32> to vector<8x256xf32>
    %49 = arith.addf %46, %48 : vector<8x256xf32>
    %cst_25 = arith.constant 0.000000e+00 : f32
    %50 = vector.broadcast %cst_25 : f32 to vector<8x256xf32>
    %51 = arith.maximumf %49, %50 : vector<8x256xf32>
    %52 = arith.truncf %51 : vector<8x256xf32> to vector<8x256xbf16>
    %c0_26 = arith.constant 0 : index
    %c0_27 = arith.constant 0 : index
    %53 = vector.load %arg13[%c0_26, %c0_27] : memref<256x128xbf16, #tpu.memory_space<vmem>>, vector<256x128xbf16>
    %cst_28 = arith.constant dense<0.000000e+00> : vector<8x128xf32>
    %54 = tpu.matmul %52, %53, %cst_28 {dimension_numbers = #tpu.dot_dimension_numbers<[1], [0], [0], [1], [0, 0, 1, 1], [], []>} : vector<8x256xbf16>, vector<256x128xbf16>, vector<8x128xf32> -> vector<8x128xf32>
    %c0_29 = arith.constant 0 : index
    %c0_30 = arith.constant 0 : index
    %55 = vector.load %arg14[%c0_29, %c0_30] : memref<1x128xf32, #tpu.memory_space<vmem>>, vector<1x128xf32>
    %56 = vector.broadcast %55 : vector<1x128xf32> to vector<8x128xf32>
    %57 = arith.addf %54, %56 : vector<8x128xf32>
    %cst_31 = arith.constant 0.000000e+00 : f32
    %58 = vector.broadcast %cst_31 : f32 to vector<8x128xf32>
    %59 = arith.maximumf %57, %58 : vector<8x128xf32>
    %c0_32 = arith.constant 0 : index
    %c0_33 = arith.constant 0 : index
    %60 = vector.load %arg15[%c0_32, %c0_33] : memref<1x128xf32, #tpu.memory_space<vmem>>, vector<1x128xf32>
    %61 = vector.broadcast %60 : vector<1x128xf32> to vector<8x128xf32>
    %62 = arith.mulf %59, %61 : vector<8x128xf32>
    %cst_34 = arith.constant dense<0.000000e+00> : vector<8xf32>
    %63 = vector.multi_reduction <add>, %62, %cst_34 [1] : vector<8x128xf32> to vector<8xf32>
    %64 = vector.shape_cast %63 : vector<8xf32> to vector<8x1xf32>
    %c0_35 = arith.constant 0 : index
    %c0_36 = arith.constant 0 : index
    %65 = vector.load %arg16[%c0_35, %c0_36] : memref<1x1xf32, #tpu.memory_space<vmem>>, vector<1x1xf32>
    %66 = vector.broadcast %65 : vector<1x1xf32> to vector<8x1xf32>
    %67 = arith.addf %64, %66 : vector<8x1xf32>
    %68 = arith.negf %67 : vector<8x1xf32>
    %69 = math.exp %68 : vector<8x1xf32>
    %cst_37 = arith.constant 1.000000e+00 : f32
    %70 = vector.broadcast %cst_37 : f32 to vector<8x1xf32>
    %71 = arith.addf %70, %69 : vector<8x1xf32>
    %72 = arith.divf %70, %71 : vector<8x1xf32>
    %cst_38 = arith.constant 4.000000e+00 : f32
    %73 = vector.broadcast %cst_38 : f32 to vector<8x1xf32>
    %74 = arith.mulf %72, %73 : vector<8x1xf32>
    %cst_39 = arith.constant 1.000000e+00 : f32
    %75 = vector.broadcast %cst_39 : f32 to vector<8x1xf32>
    %76 = arith.addf %74, %75 : vector<8x1xf32>
    %c0_40 = arith.constant 0 : index
    %c0_41 = arith.constant 0 : index
    %77 = vector.load %arg17[%c0_40, %c0_41] : memref<8x1xf32, #tpu.memory_space<vmem>>, vector<8x1xf32>
    tpu.vector_store %arg17[%c0_40, %c0_41], %76 {strides = array<i32>} : memref<8x1xf32, #tpu.memory_space<vmem>>, vector<8x1xf32>,
    return
  }
  func.func @transform_0(%arg0: i32, %arg1: memref<24xi32, #tpu.memory_space<smem>>, %arg2: memref<24xi32, #tpu.memory_space<smem>>) -> (i32, i32) {
    %c0_i32 = arith.constant 0 : i32
    %c0_i32_0 = arith.constant 0 : i32
    return %arg0, %c0_i32 : i32, i32
  }
  func.func @transform_3(%arg0: i32, %arg1: memref<24xi32, #tpu.memory_space<smem>>, %arg2: memref<24xi32, #tpu.memory_space<smem>>) -> (i32, i32) {
    %c0_i32 = arith.constant 0 : i32
    %c0_i32_0 = arith.constant 0 : i32
    %c0_i32_1 = arith.constant 0 : i32
    return %c0_i32, %c0_i32_0 : i32, i32
  }
  func.func @transform_4(%arg0: i32, %arg1: memref<24xi32, #tpu.memory_space<smem>>, %arg2: memref<24xi32, #tpu.memory_space<smem>>) -> (i32, i32) {
    %c0_i32 = arith.constant 0 : i32
    %c0_i32_0 = arith.constant 0 : i32
    %c0_i32_1 = arith.constant 0 : i32
    return %c0_i32, %c0_i32_0 : i32, i32
  }
  func.func @transform_5(%arg0: i32, %arg1: memref<24xi32, #tpu.memory_space<smem>>, %arg2: memref<24xi32, #tpu.memory_space<smem>>) -> (i32, i32) {
    %c0_i32 = arith.constant 0 : i32
    %c0_i32_0 = arith.constant 0 : i32
    %c0_i32_1 = arith.constant 0 : i32
    return %c0_i32, %c0_i32_0 : i32, i32
  }
  func.func @transform_6(%arg0: i32, %arg1: memref<24xi32, #tpu.memory_space<smem>>, %arg2: memref<24xi32, #tpu.memory_space<smem>>) -> (i32, i32) {
    %c0_i32 = arith.constant 0 : i32
    %c0_i32_0 = arith.constant 0 : i32
    %c0_i32_1 = arith.constant 0 : i32
    return %c0_i32, %c0_i32_0 : i32, i32
  }
  func.func @transform_7(%arg0: i32, %arg1: memref<24xi32, #tpu.memory_space<smem>>, %arg2: memref<24xi32, #tpu.memory_space<smem>>) -> (i32, i32) {
    %c0_i32 = arith.constant 0 : i32
    %c0_i32_0 = arith.constant 0 : i32
    %c0_i32_1 = arith.constant 0 : i32
    return %c0_i32, %c0_i32_0 : i32, i32
  }
  func.func @transform_8(%arg0: i32, %arg1: memref<24xi32, #tpu.memory_space<smem>>, %arg2: memref<24xi32, #tpu.memory_space<smem>>) -> (i32, i32) {
    %c0_i32 = arith.constant 0 : i32
    %c0_i32_0 = arith.constant 0 : i32
    %c0_i32_1 = arith.constant 0 : i32
    return %c0_i32, %c0_i32_0 : i32, i32
  }
  func.func @transform_9(%arg0: i32, %arg1: memref<24xi32, #tpu.memory_space<smem>>, %arg2: memref<24xi32, #tpu.memory_space<smem>>) -> (i32, i32) {
    %c0_i32 = arith.constant 0 : i32
    %c0_i32_0 = arith.constant 0 : i32
    %c0_i32_1 = arith.constant 0 : i32
    return %c0_i32, %c0_i32_0 : i32, i32
  }
  func.func @transform_10(%arg0: i32, %arg1: memref<24xi32, #tpu.memory_space<smem>>, %arg2: memref<24xi32, #tpu.memory_space<smem>>) -> (i32, i32) {
    %c0_i32 = arith.constant 0 : i32
    %c0_i32_0 = arith.constant 0 : i32
    %c0_i32_1 = arith.constant 0 : i32
    return %c0_i32, %c0_i32_0 : i32, i32
  }
  func.func @transform_11(%arg0: i32, %arg1: memref<24xi32, #tpu.memory_space<smem>>, %arg2: memref<24xi32, #tpu.memory_space<smem>>) -> (i32, i32) {
    %c0_i32 = arith.constant 0 : i32
    %c0_i32_0 = arith.constant 0 : i32
    %c0_i32_1 = arith.constant 0 : i32
    return %c0_i32, %c0_i32_0 : i32, i32
  }
  func.func @transform_12(%arg0: i32, %arg1: memref<24xi32, #tpu.memory_space<smem>>, %arg2: memref<24xi32, #tpu.memory_space<smem>>) -> (i32, i32) {
    %c0_i32 = arith.constant 0 : i32
    %c0_i32_0 = arith.constant 0 : i32
    %c0_i32_1 = arith.constant 0 : i32
    return %c0_i32, %c0_i32_0 : i32, i32
  }
  func.func @transform_13(%arg0: i32, %arg1: memref<24xi32, #tpu.memory_space<smem>>, %arg2: memref<24xi32, #tpu.memory_space<smem>>) -> (i32, i32) {
    %c0_i32 = arith.constant 0 : i32
    %c0_i32_0 = arith.constant 0 : i32
    %c0_i32_1 = arith.constant 0 : i32
    return %c0_i32, %c0_i32_0 : i32, i32
  }
  func.func @transform_14(%arg0: i32, %arg1: memref<24xi32, #tpu.memory_space<smem>>, %arg2: memref<24xi32, #tpu.memory_space<smem>>) -> (i32, i32) {
    %c0_i32 = arith.constant 0 : i32
    %c0_i32_0 = arith.constant 0 : i32
    return %arg0, %c0_i32 : i32, i32
  }
}

</mosaic_0001>

<llo_original>
// kernel: tpu_custom_call.1
$region0: #{tpu_custom_call.1}
  #allocation0 [shape = 'u32[]', space=smem, size = 0x4, offset = 0x4, fixed_abs, tag = 'smem constant byte address 0x4 - core index']
  #allocation1 [shape = 'u32[72,128]{1,0:T(1,128)}', space=vmem, size = 0x9000, scoped, tag = 'internal scratch']
  #allocation2 [shape = 'f32[8,256]{1,0:T(8,128)}', space=vmem, size = 0x2000, scoped, tag = 'scratch operand']
  #allocation3 [shape = 's32[2]{0}', space=sflag, size = 0x8, scoped, tag = 'scratch operand']
  #allocation4 [shape = 's32[1]{0}', space=sflag, size = 0x4, scoped, tag = 'scoped memory for tpu_custom_call.1']
  #allocation5 [shape = 'u8[512]{0}', space=smem, size = 0x200, scoped, tag = 'prefetched SMEM operand 0']
  #allocation6 [shape = 'u8[512]{0}', space=smem, size = 0x200, scoped, tag = 'prefetched SMEM operand 1']
  #allocation7 [shape = 'f32[1,1]{1,0:T(1,128)S(1)}', space=vmem, size = 0x200, scoped, tag = 'scoped memory for tpu_custom_call.1']
  #allocation15 [shape = 's32[]', space=sflag, size = 0x4, offset = 0, fixed_abs, tag = 'sflag constant byte address 0x0 - dummy sync flag']
  #allocation16 [shape = 's32[]', space=sflag, size = 0x4, offset = 0, fixed_abs, tag = 'sflag constant byte address 0x0 - dummy sync flag']
  #allocation17 [shape = 'u32[]', space=smem, size = 0x4, offset = 0x44, fixed_abs, tag = 'smem constant byte address 0x44 - assertion arg 0']
  #allocation18 [shape = 'u32[]', space=smem, size = 0x4, offset = 0x48, fixed_abs, tag = 'smem constant byte address 0x48 - assertion arg 1']
  #allocation19 [shape = 's32[]', space=sflag, size = 0x4, offset = 0, fixed_abs, tag = 'sflag constant byte address 0x0 - dummy sync flag']
  #allocation20 [shape = 's32[]', space=sflag, size = 0x4, offset = 0, fixed_abs, tag = 'sflag constant byte address 0x0 - dummy sync flag']
  %s0 = inlined_call_operand.vmem [shape: s32[24], index: 0, kind: input, shape index: {}]
  %s1 = inlined_call_operand.vmem [shape: s32[24], index: 1, kind: input, shape index: {}]
  %s2 = inlined_call_operand.vmem [shape: f32[24,4], index: 2, kind: input, shape index: {}]
  %s3 = inlined_call_operand.hbm [shape: f32[100,128], index: 3, kind: input, shape index: {}]
  %s4 = inlined_call_operand.hbm [shape: f32[50,128], index: 4, kind: input, shape index: {}]
  %s5 = inlined_call_operand.vmem [shape: f32[4,256], index: 5, kind: input, shape index: {}]
  %s6 = inlined_call_operand.vmem [shape: f32[1,256], index: 6, kind: input, shape index: {}]
  %s7 = inlined_call_operand.hbm [shape: bf16[256,128], index: 7, kind: input, shape index: {}]
  %s8 = inlined_call_operand.vmem [shape: f32[1,128], index: 8, kind: input, shape index: {}]
  %s9 = inlined_call_operand.hbm [shape: bf16[256,256], index: 9, kind: input, shape index: {}]
  %s10 = inlined_call_operand.hbm [shape: bf16[128,256], index: 10, kind: input, shape index: {}]
  %s11 = inlined_call_operand.vmem [shape: f32[1,256], index: 11, kind: input, shape index: {}]
  %s12 = inlined_call_operand.hbm [shape: bf16[256,128], index: 12, kind: input, shape index: {}]
  %s13 = inlined_call_operand.vmem [shape: f32[1,128], index: 13, kind: input, shape index: {}]
  %s14 = inlined_call_operand.vmem [shape: f32[1,128], index: 14, kind: input, shape index: {}]
  %s15 = inlined_call_operand.<no memory space> [shape: f32[1,1], index: 15, kind: input, shape index: {}]
  %s16 = inlined_call_operand.vmem [shape: f32[24,1], index: 16, kind: output, shape index: {}]
  %s17 = sld [smem:[#allocation0]]
  $region119: #{tpu_custom_call.1} parent=0
    _
  %s19 = ssub.s32 1, %s17
  %s20 = scalar_select 0, %s19, %s17
  %s22 = sshll.u32 %s0, 4
  %s23 = int_to_ptr.vmem [resolvable:$true] %s22
  %25 = dma.vmem_to_smem %s23, 16, [#allocation5], [#allocation4]
  %s27 = sshll.u32 %s1, 4
  %s28 = int_to_ptr.vmem [resolvable:$true] %s27
  %30 = dma.vmem_to_smem %s28, 16, [#allocation6], [#allocation4]
  %v31 = vstv %s15
  %32 = vst [vmem:[#allocation7] sm:$0x1] %v31
  %34 = dma.done [#allocation4], 32
  %35 = sfence
  $region1: #{tpu_custom_call.1} parent=0
    #allocation8 [shape = 'u8[65536]{0}', space=vmem, size = 0x10000, scoped, tag = 'input window, operand 7, single buffered']
    #allocation9 [shape = 's32[2]{0}', space=sflag, size = 0x8, scoped, tag = 'scoped memory for tpu_custom_call.1']
    #allocation10 [shape = 'u8[131072]{0}', space=vmem, size = 0x20000, scoped, tag = 'input window, operand 9, single buffered']
    #allocation11 [shape = 's32[1]{0}', space=sflag, size = 0x4, scoped, tag = 'scoped memory for tpu_custom_call.1']
    #allocation12 [shape = 'u8[65536]{0}', space=vmem, size = 0x10000, scoped, tag = 'input window, operand 10, single buffered']
    #allocation13 [shape = 'u8[65536]{0}', space=vmem, size = 0x10000, scoped, tag = 'input window, operand 12, single buffered']
    #allocation14 [shape = 's32[1]{0}', space=sflag, size = 0x4, scoped, tag = 'scoped memory for tpu_custom_call.1']
    %36 = vsyncpa [#allocation9], 0
    %37 = vsyncpa [#allocation11], 0
    %38 = vsyncpa [#allocation14], 0
    loop: start=0, step=1, limit=5
    $region2: #{tpu_custom_call.1} parent=1 // loop_pre_header
      _
    $region3: #{tpu_custom_call.1} parent=1 // loop_header
      %s40 = sphi 0, %s44
      %p41 = scmp.ge.s32.totalorder %s40, 5
      %s50 = sphi 0, %s52
      %s53 = sphi 0, %s50
      %s54 = sphi 0, %s53
      %s70 = sphi 0, %s54
      %s74 = sphi 0, %s74
      %s76 = sphi 0, %s74
      %s77 = sphi 0, %s76
      %s91 = sphi 0, %s77
      %s95 = sphi 0, %s95
      %s97 = sphi 0, %s95
      %s98 = sphi 0, %s97
      %s112 = sphi 0, %s98
      %s116 = sphi 0, %s116
      %s118 = sphi 0, %s116
      %s119 = sphi 0, %s118
      %s133 = sphi 0, %s119
      %s137 = sphi 0, %s137
      %s139 = sphi 0, %s137
      %s140 = sphi 0, %s139
      %s154 = sphi 0, %s140
      %s158 = sphi 0, %s158
      %s160 = sphi 0, %s158
      %s161 = sphi 0, %s160
      %s175 = sphi 0, %s161
      %s179 = sphi 0, %s179
      %s181 = sphi 0, %s179
      %s182 = sphi 0, %s181
      %s196 = sphi 0, %s182
      %s200 = sphi 0, %s200
      %s202 = sphi 0, %s200
      %s203 = sphi 0, %s202
      %s217 = sphi 0, %s203
      %s221 = sphi 0, %s221
      %s223 = sphi 0, %s221
      %s224 = sphi 0, %s223
      %s238 = sphi 0, %s224
      %s242 = sphi 0, %s242
      %s244 = sphi 0, %s242
      %s245 = sphi 0, %s244
      %s259 = sphi 0, %s245
      %s263 = sphi 0, %s263
      %s265 = sphi 0, %s263
      %s266 = sphi 0, %s265
      %s280 = sphi 0, %s266
      %s284 = sphi 0, %s284
      %s286 = sphi 0, %s284
      %s287 = sphi 0, %s286
      %s301 = sphi 0, %s287
      %s307 = sphi 0, %s309
      %s310 = sphi 0, %s307
      %s311 = sphi 0, %s310
      %s327 = sphi 0, %s311
    $region4: #{tpu_custom_call.1} parent=1 // loop_header_branch
      %43 = sbr.rel (%p41) target = $region8
    $region5: #{tpu_custom_call.1} parent=1 // loop_body
      %s45 = ssub.s32 %s40, 1
      %s46 = ssub.s32 %s40, 2
      %s47 = sadd.s32 %s40, 1
      %s48 = ssub.s32 %s40, %s47
      %p49 = scmp.eq.s32.totalorder %s48, 0
      %s51 = sadd.s32 %s50, 1
      %s52 = scalar_select %p49, %s50, %s51
      %p55 = pneg %p49
      %p56 = scmp.eq.s32.totalorder %s40, 2
      %p57 = por %p55, %p56
      %p58 = scmp.ne.s32.totalorder %s50, %s53
      %p59 = scmp.eq.s32.totalorder %s40, 0
      %p60 = por %p58, %p59
      %p61 = scmp.ne.s32.totalorder %s50, %s53
      %p62 = scmp.eq.s32.totalorder %s45, 2
      %p63 = por %p61, %p62
      %p64 = scmp.ne.s32.totalorder %s53, %s54
      %p65 = scmp.eq.s32.totalorder %s45, 0
      %p66 = por %p64, %p65
      %p67 = scmp.ne.s32.totalorder %s53, %s54
      %p68 = scmp.eq.s32.totalorder %s46, 2
      %p69 = por %p67, %p68
      %p71 = scmp.ne.s32.totalorder %s54, %s70
      %p72 = scmp.eq.s32.totalorder %s46, 0
      %p73 = por %p71, %p72
      %s75 = sadd.s32 %s74, 1
      %p78 = scmp.eq.s32.totalorder %s40, 2
      %p79 = scmp.ne.s32.totalorder %s74, %s76
      %p80 = scmp.eq.s32.totalorder %s40, 0
      %p81 = por %p79, %p80
      %p82 = scmp.ne.s32.totalorder %s74, %s76
      %p83 = scmp.eq.s32.totalorder %s45, 2
      %p84 = por %p82, %p83
      %p85 = scmp.ne.s32.totalorder %s76, %s77
      %p86 = scmp.eq.s32.totalorder %s45, 0
      %p87 = por %p85, %p86
      %p88 = scmp.ne.s32.totalorder %s76, %s77
      %p89 = scmp.eq.s32.totalorder %s46, 2
      %p90 = por %p88, %p89
      %p92 = scmp.ne.s32.totalorder %s77, %s91
      %p93 = scmp.eq.s32.totalorder %s46, 0
      %p94 = por %p92, %p93
      %s96 = sadd.s32 %s95, 1
      %p99 = scmp.eq.s32.totalorder %s40, 2
      %p100 = scmp.ne.s32.totalorder %s95, %s97
      %p101 = scmp.eq.s32.totalorder %s40, 0
      %p102 = por %p100, %p101
      %p103 = scmp.ne.s32.totalorder %s95, %s97
      %p104 = scmp.eq.s32.totalorder %s45, 2
      %p105 = por %p103, %p104
      %p106 = scmp.ne.s32.totalorder %s97, %s98
      %p107 = scmp.eq.s32.totalorder %s45, 0
      %p108 = por %p106, %p107
      %p109 = scmp.ne.s32.totalorder %s97, %s98
      %p110 = scmp.eq.s32.totalorder %s46, 2
      %p111 = por %p109, %p110
      %p113 = scmp.ne.s32.totalorder %s98, %s112
      %p114 = scmp.eq.s32.totalorder %s46, 0
      %p115 = por %p113, %p114
      %s117 = sadd.s32 %s116, 1
      %p120 = scmp.eq.s32.totalorder %s40, 2
      %p121 = scmp.ne.s32.totalorder %s116, %s118
      %p122 = scmp.eq.s32.totalorder %s40, 0
      %p123 = por %p121, %p122
      %p124 = scmp.ne.s32.totalorder %s116, %s118
      %p125 = scmp.eq.s32.totalorder %s45, 2
      %p126 = por %p124, %p125
      %p127 = scmp.ne.s32.totalorder %s118, %s119
      %p128 = scmp.eq.s32.totalorder %s45, 0
      %p129 = por %p127, %p128
      %p130 = scmp.ne.s32.totalorder %s118, %s119
      %p131 = scmp.eq.s32.totalorder %s46, 2
      %p132 = por %p130, %p131
      %p134 = scmp.ne.s32.totalorder %s119, %s133
      %p135 = scmp.eq.s32.totalorder %s46, 0
      %p136 = por %p134, %p135
      %s138 = sadd.s32 %s137, 1
      %p141 = scmp.eq.s32.totalorder %s40, 2
      %p142 = scmp.ne.s32.totalorder %s137, %s139
      %p143 = scmp.eq.s32.totalorder %s40, 0
      %p144 = por %p142, %p143
      %p145 = scmp.ne.s32.totalorder %s137, %s139
      %p146 = scmp.eq.s32.totalorder %s45, 2
      %p147 = por %p145, %p146
      %p148 = scmp.ne.s32.totalorder %s139, %s140
      %p149 = scmp.eq.s32.totalorder %s45, 0
      %p150 = por %p148, %p149
      %p151 = scmp.ne.s32.totalorder %s139, %s140
      %p152 = scmp.eq.s32.totalorder %s46, 2
      %p153 = por %p151, %p152
      %p155 = scmp.ne.s32.totalorder %s140, %s154
      %p156 = scmp.eq.s32.totalorder %s46, 0
      %p157 = por %p155, %p156
      %s159 = sadd.s32 %s158, 1
      %p162 = scmp.eq.s32.totalorder %s40, 2
      %p163 = scmp.ne.s32.totalorder %s158, %s160
      %p164 = scmp.eq.s32.totalorder %s40, 0
      %p165 = por %p163, %p164
      %p166 = scmp.ne.s32.totalorder %s158, %s160
      %p167 = scmp.eq.s32.totalorder %s45, 2
      %p168 = por %p166, %p167
      %p169 = scmp.ne.s32.totalorder %s160, %s161
      %p170 = scmp.eq.s32.totalorder %s45, 0
      %p171 = por %p169, %p170
      %p172 = scmp.ne.s32.totalorder %s160, %s161
      %p173 = scmp.eq.s32.totalorder %s46, 2
      %p174 = por %p172, %p173
      %p176 = scmp.ne.s32.totalorder %s161, %s175
      %p177 = scmp.eq.s32.totalorder %s46, 0
      %p178 = por %p176, %p177
      %s180 = sadd.s32 %s179, 1
      %p183 = scmp.eq.s32.totalorder %s40, 2
      %p184 = scmp.ne.s32.totalorder %s179, %s181
      %p185 = scmp.eq.s32.totalorder %s40, 0
      %p186 = por %p184, %p185
      %p187 = scmp.ne.s32.totalorder %s179, %s181
      %p188 = scmp.eq.s32.totalorder %s45, 2
      %p189 = por %p187, %p188
      %p190 = scmp.ne.s32.totalorder %s181, %s182
      %p191 = scmp.eq.s32.totalorder %s45, 0
      %p192 = por %p190, %p191
      %p193 = scmp.ne.s32.totalorder %s181, %s182
      %p194 = scmp.eq.s32.totalorder %s46, 2
      %p195 = por %p193, %p194
      %p197 = scmp.ne.s32.totalorder %s182, %s196
      %p198 = scmp.eq.s32.totalorder %s46, 0
      %p199 = por %p197, %p198
      %s201 = sadd.s32 %s200, 1
      %p204 = scmp.eq.s32.totalorder %s40, 2
      %p205 = scmp.ne.s32.totalorder %s200, %s202
      %p206 = scmp.eq.s32.totalorder %s40, 0
      %p207 = por %p205, %p206
      %p208 = scmp.ne.s32.totalorder %s200, %s202
      %p209 = scmp.eq.s32.totalorder %s45, 2
      %p210 = por %p208, %p209
      %p211 = scmp.ne.s32.totalorder %s202, %s203
      %p212 = scmp.eq.s32.totalorder %s45, 0
      %p213 = por %p211, %p212
      %p214 = scmp.ne.s32.totalorder %s202, %s203
      %p215 = scmp.eq.s32.totalorder %s46, 2
      %p216 = por %p214, %p215
      %p218 = scmp.ne.s32.totalorder %s203, %s217
      %p219 = scmp.eq.s32.totalorder %s46, 0
      %p220 = por %p218, %p219
      %s222 = sadd.s32 %s221, 1
      %p225 = scmp.eq.s32.totalorder %s40, 2
      %p226 = scmp.ne.s32.totalorder %s221, %s223
      %p227 = scmp.eq.s32.totalorder %s40, 0
      %p228 = por %p226, %p227
      %p229 = scmp.ne.s32.totalorder %s221, %s223
      %p230 = scmp.eq.s32.totalorder %s45, 2
      %p231 = por %p229, %p230
      %p232 = scmp.ne.s32.totalorder %s223, %s224
      %p233 = scmp.eq.s32.totalorder %s45, 0
      %p234 = por %p232, %p233
      %p235 = scmp.ne.s32.totalorder %s223, %s224
      %p236 = scmp.eq.s32.totalorder %s46, 2
      %p237 = por %p235, %p236
      %p239 = scmp.ne.s32.totalorder %s224, %s238
      %p240 = scmp.eq.s32.totalorder %s46, 0
      %p241 = por %p239, %p240
      %s243 = sadd.s32 %s242, 1
      %p246 = scmp.eq.s32.totalorder %s40, 2
      %p247 = scmp.ne.s32.totalorder %s242, %s244
      %p248 = scmp.eq.s32.totalorder %s40, 0
      %p249 = por %p247, %p248
      %p250 = scmp.ne.s32.totalorder %s242, %s244
      %p251 = scmp.eq.s32.totalorder %s45, 2
      %p252 = por %p250, %p251
      %p253 = scmp.ne.s32.totalorder %s244, %s245
      %p254 = scmp.eq.s32.totalorder %s45, 0
      %p255 = por %p253, %p254
      %p256 = scmp.ne.s32.totalorder %s244, %s245
      %p257 = scmp.eq.s32.totalorder %s46, 2
      %p258 = por %p256, %p257
      %p260 = scmp.ne.s32.totalorder %s245, %s259
      %p261 = scmp.eq.s32.totalorder %s46, 0
      %p262 = por %p260, %p261
      %s264 = sadd.s32 %s263, 1
      %p267 = scmp.eq.s32.totalorder %s40, 2
      %p268 = scmp.ne.s32.totalorder %s263, %s265
      %p269 = scmp.eq.s32.totalorder %s40, 0
      %p270 = por %p268, %p269
      %p271 = scmp.ne.s32.totalorder %s263, %s265
      %p272 = scmp.eq.s32.totalorder %s45, 2
      %p273 = por %p271, %p272
      %p274 = scmp.ne.s32.totalorder %s265, %s266
      %p275 = scmp.eq.s32.totalorder %s45, 0
      %p276 = por %p274, %p275
      %p277 = scmp.ne.s32.totalorder %s265, %s266
      %p278 = scmp.eq.s32.totalorder %s46, 2
      %p279 = por %p277, %p278
      %p281 = scmp.ne.s32.totalorder %s266, %s280
      %p282 = scmp.eq.s32.totalorder %s46, 0
      %p283 = por %p281, %p282
      %s285 = sadd.s32 %s284, 1
      %p288 = scmp.eq.s32.totalorder %s40, 2
      %p289 = scmp.ne.s32.totalorder %s284, %s286
      %p290 = scmp.eq.s32.totalorder %s40, 0
      %p291 = por %p289, %p290
      %p292 = scmp.ne.s32.totalorder %s284, %s286
      %p293 = scmp.eq.s32.totalorder %s45, 2
      %p294 = por %p292, %p293
      %p295 = scmp.ne.s32.totalorder %s286, %s287
      %p296 = scmp.eq.s32.totalorder %s45, 0
      %p297 = por %p295, %p296
      %p298 = scmp.ne.s32.totalorder %s286, %s287
      %p299 = scmp.eq.s32.totalorder %s46, 2
      %p300 = por %p298, %p299
      %p302 = scmp.ne.s32.totalorder %s287, %s301
      %p303 = scmp.eq.s32.totalorder %s46, 0
      %p304 = por %p302, %p303
      %s305 = ssub.s32 %s40, %s47
      %p306 = scmp.eq.s32.totalorder %s305, 0
      %s308 = sadd.s32 %s307, 1
      %s309 = scalar_select %p306, %s307, %s308
      %p312 = pneg %p306
      %p313 = scmp.eq.s32.totalorder %s40, 2
      %p314 = por %p312, %p313
      %p315 = scmp.ne.s32.totalorder %s307, %s310
      %p316 = scmp.eq.s32.totalorder %s40, 0
      %p317 = por %p315, %p316
      %p318 = scmp.ne.s32.totalorder %s307, %s310
      %p319 = scmp.eq.s32.totalorder %s45, 2
      %p320 = por %p318, %p319
      %p321 = scmp.ne.s32.totalorder %s310, %s311
      %p322 = scmp.eq.s32.totalorder %s45, 0
      %p323 = por %p321, %p322
      %p324 = scmp.ne.s32.totalorder %s310, %s311
      %p325 = scmp.eq.s32.totalorder %s46, 2
      %p326 = por %p324, %p325
      %p328 = scmp.ne.s32.totalorder %s311, %s327
      %p329 = scmp.eq.s32.totalorder %s46, 0
      %p330 = por %p328, %p329
      %p331 = scmp.le.s32.totalorder 1, %s40
      %p332 = scmp.lt.s32.totalorder %s40, 4
      %p333 = pnand %p331, %p332
      %p334 = pneg %p333
      // Predicated region
      $region9: #{tpu_custom_call.1} parent=5 // pred_check
        _
      $region10: #{tpu_custom_call.1} parent=5 // pred_check_branch
        %336 = sbr.rel (%p333) target = $region12
      $region11: #{tpu_custom_call.1} parent=5 // pred_region
        %s337 = ssub.s32 %s40, 1
        // Predicated region
        $region13: #{tpu_custom_call.1} parent=11 // pred_check
          %p338 = pneg %p87
        $region14: #{tpu_custom_call.1} parent=11 // pred_check_branch
          %340 = sbr.rel (%p338) target = $region16
        $region15: #{tpu_custom_call.1} parent=11 // pred_region
          _
        $region16: #{tpu_custom_call.1} parent=11 // pred_fallthru
          _
        // Predicated region
        $region17: #{tpu_custom_call.1} parent=11 // pred_check
          %p341 = pneg %p108
        $region18: #{tpu_custom_call.1} parent=11 // pred_check_branch
          %343 = sbr.rel (%p341) target = $region20
        $region19: #{tpu_custom_call.1} parent=11 // pred_region
          _
        $region20: #{tpu_custom_call.1} parent=11 // pred_fallthru
          _
        // Predicated region
        $region21: #{tpu_custom_call.1} parent=11 // pred_check
          %p344 = pneg %p129
        $region22: #{tpu_custom_call.1} parent=11 // pred_check_branch
          %346 = sbr.rel (%p344) target = $region24
        $region23: #{tpu_custom_call.1} parent=11 // pred_region
          %348 = vsyncadd [#allocation9], 0
          %s349 = sshll.u32 %s7, 4
          %s350 = int_to_ptr.hbm [resolvable:$true] %s349
          %s351 = sshll.u32 [#allocation8], 4
          %s352 = int_to_ptr.vmem [resolvable:$true] %s351
          %357 = dma.hbm_to_vmem [thread:$0]  %s350, 2048, %s352, [#allocation9], 64, 64, 4
        $region24: #{tpu_custom_call.1} parent=11 // pred_fallthru
          _
        // Predicated region
        $region25: #{tpu_custom_call.1} parent=11 // pred_check
          %p358 = pneg %p150
        $region26: #{tpu_custom_call.1} parent=11 // pred_check_branch
          %360 = sbr.rel (%p358) target = $region28
        $region27: #{tpu_custom_call.1} parent=11 // pred_region
          _
        $region28: #{tpu_custom_call.1} parent=11 // pred_fallthru
          _
        // Predicated region
        $region29: #{tpu_custom_call.1} parent=11 // pred_check
          %p361 = pneg %p171
        $region30: #{tpu_custom_call.1} parent=11 // pred_check_branch
          %363 = sbr.rel (%p361) target = $region32
        $region31: #{tpu_custom_call.1} parent=11 // pred_region
          %365 = vsyncadd [#allocation11], 0
          %s366 = sshll.u32 %s9, 4
          %s367 = int_to_ptr.hbm [resolvable:$true] %s366
          %s368 = sshll.u32 [#allocation10], 4
          %s369 = int_to_ptr.vmem [resolvable:$true] %s368
          %374 = dma.hbm_to_vmem [thread:$0]  %s367, 4096, %s369, [#allocation11], 128, 128, 8
        $region32: #{tpu_custom_call.1} parent=11 // pred_fallthru
          _
        // Predicated region
        $region33: #{tpu_custom_call.1} parent=11 // pred_check
          %p375 = pneg %p192
        $region34: #{tpu_custom_call.1} parent=11 // pred_check_branch
          %377 = sbr.rel (%p375) target = $region36
        $region35: #{tpu_custom_call.1} parent=11 // pred_region
          %379 = vsyncadd [#allocation11], 0
          %s380 = sshll.u32 %s10, 4
          %s381 = int_to_ptr.hbm [resolvable:$true] %s380
          %s382 = sshll.u32 [#allocation12], 4
          %s383 = int_to_ptr.vmem [resolvable:$true] %s382
          %388 = dma.hbm_to_vmem [thread:$0]  %s381, 2048, %s383, [#allocation11], 128, 128, 8
        $region36: #{tpu_custom_call.1} parent=11 // pred_fallthru
          _
        // Predicated region
        $region37: #{tpu_custom_call.1} parent=11 // pred_check
          %p389 = pneg %p213
        $region38: #{tpu_custom_call.1} parent=11 // pred_check_branch
          %391 = sbr.rel (%p389) target = $region40
        $region39: #{tpu_custom_call.1} parent=11 // pred_region
          _
        $region40: #{tpu_custom_call.1} parent=11 // pred_fallthru
          _
        // Predicated region
        $region41: #{tpu_custom_call.1} parent=11 // pred_check
          %p392 = pneg %p234
        $region42: #{tpu_custom_call.1} parent=11 // pred_check_branch
          %394 = sbr.rel (%p392) target = $region44
        $region43: #{tpu_custom_call.1} parent=11 // pred_region
          %396 = vsyncadd [#allocation14], 0
          %s397 = sshll.u32 %s12, 4
          %s398 = int_to_ptr.hbm [resolvable:$true] %s397
          %s399 = sshll.u32 [#allocation13], 4
          %s400 = int_to_ptr.vmem [resolvable:$true] %s399
          %405 = dma.hbm_to_vmem [thread:$0]  %s398, 2048, %s400, [#allocation14], 64, 64, 4
        $region44: #{tpu_custom_call.1} parent=11 // pred_fallthru
          _
        // Predicated region
        $region45: #{tpu_custom_call.1} parent=11 // pred_check
          %p406 = pneg %p255
        $region46: #{tpu_custom_call.1} parent=11 // pred_check_branch
          %408 = sbr.rel (%p406) target = $region48
        $region47: #{tpu_custom_call.1} parent=11 // pred_region
          _
        $region48: #{tpu_custom_call.1} parent=11 // pred_fallthru
          _
        // Predicated region
        $region49: #{tpu_custom_call.1} parent=11 // pred_check
          %p409 = pneg %p276
        $region50: #{tpu_custom_call.1} parent=11 // pred_check_branch
          %411 = sbr.rel (%p409) target = $region52
        $region51: #{tpu_custom_call.1} parent=11 // pred_region
          _
        $region52: #{tpu_custom_call.1} parent=11 // pred_fallthru
          _
        // Predicated region
        $region53: #{tpu_custom_call.1} parent=11 // pred_check
          %p412 = pneg %p297
        $region54: #{tpu_custom_call.1} parent=11 // pred_check_branch
          %414 = sbr.rel (%p412) target = $region56
        $region55: #{tpu_custom_call.1} parent=11 // pred_region
          _
        $region56: #{tpu_custom_call.1} parent=11 // pred_fallthru
          _
      $region12: #{tpu_custom_call.1} parent=5 // pred_fallthru
        _
      %p415 = scmp.lt.s32.totalorder %s40, 3
      // Predicated region
      $region57: #{tpu_custom_call.1} parent=5 // pred_check
        %p416 = pneg %p415
      $region58: #{tpu_custom_call.1} parent=5 // pred_check_branch
        %418 = sbr.rel (%p416) target = $region60
      $region59: #{tpu_custom_call.1} parent=5 // pred_region
        // Predicated region
        $region61: #{tpu_custom_call.1} parent=59 // pred_check
          %p419 = pneg %p60
        $region62: #{tpu_custom_call.1} parent=59 // pred_check_branch
          %421 = sbr.rel (%p419) target = $region64
        $region63: #{tpu_custom_call.1} parent=59 // pred_region
          %p422 = scmp.lt.s32.totalorder %s40, 2
          %s423 = scalar_select %p422, %s40, 2
          %s424 = smul.addr %s423, 8
          %s425 = scalar_lea.vmem %s2, %s424
        $region64: #{tpu_custom_call.1} parent=59 // pred_fallthru
          _
      $region60: #{tpu_custom_call.1} parent=5 // pred_fallthru
        _
      %p426 = scmp.le.s32.totalorder 1, %s40
      %p427 = scmp.lt.s32.totalorder %s40, 4
      %p428 = pnand %p426, %p427
      %p429 = pneg %p428
      // Predicated region
      $region65: #{tpu_custom_call.1} parent=5 // pred_check
        _
      $region66: #{tpu_custom_call.1} parent=5 // pred_check_branch
        %431 = sbr.rel (%p428) target = $region68
      $region67: #{tpu_custom_call.1} parent=5 // pred_region
        %s432 = ssub.s32 %s40, 1
        // Predicated region
        $region69: #{tpu_custom_call.1} parent=67 // pred_check
          %p433 = pneg %p129
        $region70: #{tpu_custom_call.1} parent=67 // pred_check_branch
          %435 = sbr.rel (%p433) target = $region72
        $region71: #{tpu_custom_call.1} parent=67 // pred_region
          %437 = dma.done [#allocation9], 2048
        $region72: #{tpu_custom_call.1} parent=67 // pred_fallthru
          _
        // Predicated region
        $region73: #{tpu_custom_call.1} parent=67 // pred_check
          %p438 = pneg %p171
        $region74: #{tpu_custom_call.1} parent=67 // pred_check_branch
          %440 = sbr.rel (%p438) target = $region76
        $region75: #{tpu_custom_call.1} parent=67 // pred_region
          %442 = dma.done [#allocation11], 4096
        $region76: #{tpu_custom_call.1} parent=67 // pred_fallthru
          _
        // Predicated region
        $region77: #{tpu_custom_call.1} parent=67 // pred_check
          %p443 = pneg %p192
        $region78: #{tpu_custom_call.1} parent=67 // pred_check_branch
          %445 = sbr.rel (%p443) target = $region80
        $region79: #{tpu_custom_call.1} parent=67 // pred_region
          %447 = dma.done [#allocation11], 2048
        $region80: #{tpu_custom_call.1} parent=67 // pred_fallthru
          _
        // Predicated region
        $region81: #{tpu_custom_call.1} parent=67 // pred_check
          %p448 = pneg %p234
        $region82: #{tpu_custom_call.1} parent=67 // pred_check_branch
          %450 = sbr.rel (%p448) target = $region84
        $region83: #{tpu_custom_call.1} parent=67 // pred_region
          %452 = dma.done [#allocation14], 2048
        $region84: #{tpu_custom_call.1} parent=67 // pred_fallthru
          _
        %p453 = scmp.lt.s32.totalorder %s45, 2
        %s454 = scalar_select %p453, %s45, 2
        %s455 = smul.addr %s454, 8
        %s456 = scalar_lea.vmem %s2, %s455
        %p457 = pneg %p66
        %p458 = pneg %p63
        %p459 = pneg %p87
        %p460 = pneg %p84
        %p461 = pneg %p108
        %p462 = pneg %p105
        %p463 = pneg %p129
        %p464 = pneg %p126
        %p465 = pneg %p150
        %p466 = pneg %p147
        %p467 = pneg %p171
        %p468 = pneg %p168
        %p469 = pneg %p192
        %p470 = pneg %p189
        %p471 = pneg %p213
        %p472 = pneg %p210
        %p473 = pneg %p234
        %p474 = pneg %p231
        %p475 = pneg %p255
        %p476 = pneg %p252
        %p477 = pneg %p276
        %p478 = pneg %p273
        %p479 = pneg %p297
        %p480 = pneg %p294
        %p481 = pneg %p323
        %p482 = pneg %p320
        %p483 = scmp.lt.s32.totalorder %s45, 2
        %s484 = scalar_select %p483, %s45, 2
        %s485 = smul.addr %s484, 8
        %s486 = scalar_lea.vmem %s16, %s485
        %p487 = scmp.lt.s32.totalorder %s45, 2
        %s488 = scalar_select %p487, %s45, 2
        %s489 = smul.addr %s488, 8
        %s490 = scalar_lea.vmem %s2, %s489
        %p491 = scmp.lt.s32.totalorder %s45, 2
        %s492 = scalar_select %p491, %s45, 2
        %s493 = smul.addr %s492, 8
        %s494 = scalar_lea.vmem %s16, %s493
        %s495 = smul.u32 %s45, 8
        loop: start=0, step=1, limit=8
        $region85: #{tpu_custom_call.1} parent=67 // loop_pre_header
          _
        $region86: #{tpu_custom_call.1} parent=67 // loop_header
          %s497 = sphi 0, %s501
          %p498 = scmp.ge.s32.totalorder %s497, 8
        $region87: #{tpu_custom_call.1} parent=67 // loop_header_branch
          %500 = sbr.rel (%p498) target = $region91
        $region88: #{tpu_custom_call.1} parent=67 // loop_body
          %s502 = sadd.s32 %s495, %s497
          %s503 = sld [smem:[#allocation5 + %s502]]
          %s504 = sld [smem:[#allocation6 + %s502]]
          %s505 = scalar_lea.hbm %s3, %s503
          %s506 = sshrl.u32 %s497, 3
          %s507 = sand.u32 %s497, 7
          %s508 = smul.u32 %s506, 16
          %s509 = sadd.s32 %s507, %s508
          %s510 = scalar_lea.vmem [#allocation2], %s509
          // Predicated region
          $region92: #{tpu_custom_call.1} parent=88 // pred_check
            _
          $region93: #{tpu_custom_call.1} parent=88 // pred_check_branch
            %512 = sbr.rel target = $region95
          $region94: #{tpu_custom_call.1} parent=88 // pred_region
            %513 = sst [smem:[#allocation17]] [#allocation16]
            %514 = sst [smem:[#allocation18]] [#allocation15]
          $region95: #{tpu_custom_call.1} parent=88 // pred_fallthru
            _
          %516 = shalt.err (0)
          %s518 = sshll.u32 %s505, 4
          %s519 = int_to_ptr.hbm [resolvable:$true] %s518
          %s520 = sshll.u32 %s510, 4
          %s521 = int_to_ptr.vmem [resolvable:$true] %s520
          %523 = dma.hbm_to_vmem [thread:$0]  %s519, 16, %s521, [#allocation3]
          %s524 = scalar_lea.hbm %s4, %s504
          %s525 = sadd.s32 8, %s509
          %s526 = scalar_lea.vmem [#allocation2], %s525
          %s527 = scalar_lea.sflag [#allocation3], 1
          // Predicated region
          $region96: #{tpu_custom_call.1} parent=88 // pred_check
            _
          $region97: #{tpu_custom_call.1} parent=88 // pred_check_branch
            %529 = sbr.rel target = $region99
          $region98: #{tpu_custom_call.1} parent=88 // pred_region
            %530 = sst [smem:[#allocation17]] [#allocation20]
            %531 = sst [smem:[#allocation18]] [#allocation19]
          $region99: #{tpu_custom_call.1} parent=88 // pred_fallthru
            _
          %533 = shalt.err (0)
          %s535 = sshll.u32 %s524, 4
          %s536 = int_to_ptr.hbm [resolvable:$true] %s535
          %s537 = sshll.u32 %s526, 4
          %s538 = int_to_ptr.vmem [resolvable:$true] %s537
          %540 = dma.hbm_to_vmem [thread:$0]  %s536, 16, %s538, %s527
        $region89: #{tpu_custom_call.1} parent=67 // loop_footer
          %s501 = sadd.s32 1, %s497
        $region90: #{tpu_custom_call.1} parent=67 // loop_footer_branch
          %496 = sbr.rel target = $region86
        $region91: #{tpu_custom_call.1} parent=67 // loop_exit
          _
        %v541 = vld [vmem:[%s490] sm:$0xff]
        %v542 = vld [vmem:[%s5] sm:$0xff]
        %544 = vset.pattern.permute.xlu0 0
        %545 = vperm.xlu0 %544, %v541
        %v546 = vpop.permute.xlu0 %545
        %v549 = vperm.slane %v542, 0
        %v550 = vperm.slane %v542, 4
        %v553 = vperm.slane %v549, 0
        %v554 = vperm.slane %v550, 0
        %v555 = vmul.f32 %v546, %v553
        %v556 = vmul.f32 %v546, %v554
        %557 = vset.pattern.permute.xlu0 1
        %558 = vperm.xlu0 %557, %v541
        %v559 = vpop.permute.xlu0 %558
        %v561 = vperm.slane %v542, 1
        %v562 = vperm.slane %v542, 5
        %v565 = vperm.slane %v561, 1
        %v566 = vperm.slane %v562, 1
        %v567 = vmul.f32 %v559, %v565
        %v568 = vmul.f32 %v559, %v566
        %v569 = vadd.f32 %v555, %v567
        %v570 = vadd.f32 %v556, %v568
        %571 = vset.pattern.permute.xlu0 2
        %572 = vperm.xlu0 %571, %v541
        %v573 = vpop.permute.xlu0 %572
        %v575 = vperm.slane %v542, 2
        %v576 = vperm.slane %v542, 6
        %v579 = vperm.slane %v575, 2
        %v580 = vperm.slane %v576, 2
        %v581 = vmul.f32 %v573, %v579
        %v582 = vmul.f32 %v573, %v580
        %v583 = vadd.f32 %v569, %v581
        %v584 = vadd.f32 %v570, %v582
        %585 = vset.pattern.permute.xlu0 3
        %586 = vperm.xlu0 %585, %v541
        %v587 = vpop.permute.xlu0 %586
        %v589 = vperm.slane %v542, 3
        %v590 = vperm.slane %v542, 7
        %v593 = vperm.slane %v589, 3
        %v594 = vperm.slane %v590, 3
        %v595 = vmul.f32 %v587, %v593
        %v596 = vmul.f32 %v587, %v594
        %v597 = vadd.f32 %v583, %v595
        %v598 = vadd.f32 %v584, %v596
        %v599 = vld [vmem:[%s6] sm:$0x3]
        %v601 = vperm.slane %v599, 0
        %v602 = vperm.slane %v599, 1
        %v605 = vadd.f32 %v597, %v601
        %v606 = vadd.f32 %v598, %v602
        %v607 = vmax.f32 %v605, 0.0
        %v608 = vmax.f32 %v606, 0.0
        %v609 = vpack.c.bf16 %v607, %v607
        %v610 = vpack.c.bf16 %v608, %v608
        %v611 = vld [vmem:[#allocation8] sm:$0xf]
        %v612 = vld [vmem:[#allocation8 + $0x4] sm:$0xf]
        %v613 = vld [vmem:[#allocation8 + $0x8] sm:$0xf]
        %v614 = vld [vmem:[#allocation8 + $0xc] sm:$0xf]
        %v615 = vld [vmem:[#allocation8 + $0x10] sm:$0xf]
        %v616 = vld [vmem:[#allocation8 + $0x14] sm:$0xf]
        %v617 = vld [vmem:[#allocation8 + $0x18] sm:$0xf]
        %v618 = vld [vmem:[#allocation8 + $0x1c] sm:$0xf]
        %v619 = vld [vmem:[#allocation8 + $0x20] sm:$0xf]
        %v620 = vld [vmem:[#allocation8 + $0x24] sm:$0xf]
        %v621 = vld [vmem:[#allocation8 + $0x28] sm:$0xf]
        %v622 = vld [vmem:[#allocation8 + $0x2c] sm:$0xf]
        %v623 = vld [vmem:[#allocation8 + $0x30] sm:$0xf]
        %v624 = vld [vmem:[#allocation8 + $0x34] sm:$0xf]
        %v625 = vld [vmem:[#allocation8 + $0x38] sm:$0xf]
        %v626 = vld [vmem:[#allocation8 + $0x3c] sm:$0xf]
        %v627 = vld [vmem:[#allocation8 + $0x40] sm:$0xf]
        %v628 = vld [vmem:[#allocation8 + $0x44] sm:$0xf]
        %v629 = vld [vmem:[#allocation8 + $0x48] sm:$0xf]
        %v630 = vld [vmem:[#allocation8 + $0x4c] sm:$0xf]
        %v631 = vld [vmem:[#allocation8 + $0x50] sm:$0xf]
        %v632 = vld [vmem:[#allocation8 + $0x54] sm:$0xf]
        %v633 = vld [vmem:[#allocation8 + $0x58] sm:$0xf]
        %v634 = vld [vmem:[#allocation8 + $0x5c] sm:$0xf]
        %v635 = vld [vmem:[#allocation8 + $0x60] sm:$0xf]
        %v636 = vld [vmem:[#allocation8 + $0x64] sm:$0xf]
        %v637 = vld [vmem:[#allocation8 + $0x68] sm:$0xf]
        %v638 = vld [vmem:[#allocation8 + $0x6c] sm:$0xf]
        %v639 = vld [vmem:[#allocation8 + $0x70] sm:$0xf]
        %v640 = vld [vmem:[#allocation8 + $0x74] sm:$0xf]
        %v641 = vld [vmem:[#allocation8 + $0x78] sm:$0xf]
        %v642 = vld [vmem:[#allocation8 + $0x7c] sm:$0xf]
        %v643 = vld [vmem:[%s8] sm:$0x1]
        %v645 = vperm.slane %v643, 0
        %v679 = vunpack.c.l.b16 %v611
        %v680 = vunpack.c.l.b16 %v612
        %v681 = vunpack.c.l.b16 %v613
        %v682 = vunpack.c.l.b16 %v614
        %v683 = vunpack.c.l.b16 %v615
        %v684 = vunpack.c.l.b16 %v616
        %v685 = vunpack.c.l.b16 %v617
        %v686 = vunpack.c.l.b16 %v618
        %v687 = vunpack.c.l.b16 %v619
        %v688 = vunpack.c.l.b16 %v620
        %v689 = vunpack.c.l.b16 %v621
        %v690 = vunpack.c.l.b16 %v622
        %v691 = vunpack.c.l.b16 %v623
        %v692 = vunpack.c.l.b16 %v624
        %v693 = vunpack.c.l.b16 %v625
        %v694 = vunpack.c.l.b16 %v626
        %v695 = vunpack.c.l.b16 %v627
        %v696 = vunpack.c.l.b16 %v628
        %v697 = vunpack.c.l.b16 %v629
        %v698 = vunpack.c.l.b16 %v630
        %v699 = vunpack.c.l.b16 %v631
        %v700 = vunpack.c.l.b16 %v632
        %v701 = vunpack.c.l.b16 %v633
        %v702 = vunpack.c.l.b16 %v634
        %v703 = vunpack.c.l.b16 %v635
        %v704 = vunpack.c.l.b16 %v636
        %v705 = vunpack.c.l.b16 %v637
        %v706 = vunpack.c.l.b16 %v638
        %v707 = vunpack.c.l.b16 %v639
        %v708 = vunpack.c.l.b16 %v640
        %v709 = vunpack.c.l.b16 %v641
        %v710 = vunpack.c.l.b16 %v642
        %v711 = vpack.c.b16 %v680, %v679
        %v712 = vpack.c.b16 %v682, %v681
        %v713 = vpack.c.b16 %v684, %v683
        %v714 = vpack.c.b16 %v686, %v685
        %v715 = vpack.c.b16 %v688, %v687
        %v716 = vpack.c.b16 %v690, %v689
        %v717 = vpack.c.b16 %v692, %v691
        %v718 = vpack.c.b16 %v694, %v693
        %v719 = vpack.c.b16 %v696, %v695
        %v720 = vpack.c.b16 %v698, %v697
        %v721 = vpack.c.b16 %v700, %v699
        %v722 = vpack.c.b16 %v702, %v701
        %v723 = vpack.c.b16 %v704, %v703
        %v724 = vpack.c.b16 %v706, %v705
        %v725 = vpack.c.b16 %v708, %v707
        %v726 = vpack.c.b16 %v710, %v709
        %743 = vmatpush.bf16.msra.mxu0 %v718
        %744 = vmatpush.bf16.msra.mxu0 %v717
        %745 = vmatpush.bf16.msra.mxu0 %v716
        %746 = vmatpush.bf16.msra.mxu0 %v715
        %747 = vmatpush.bf16.msra.mxu0 %v714
        %748 = vmatpush.bf16.msra.mxu0 %v713
        %749 = vmatpush.bf16.msra.mxu0 %v712
        %750 = vmatpush.bf16.msra.mxu0 %v711
        %751 = vmatmul.bf16.gmra.mxu0 %v609
        %v752 = vpop.f32.mrf.mxu0
        %v753 = vadd.f32 %v645, %v752
        %v754 = vpop.f32.mrf.mxu0
        %755 = vdwg.mxu0
        %756 = vmatpush.bf16.msra.mxu0 %v726
        %757 = vmatpush.bf16.msra.mxu0 %v725
        %758 = vmatpush.bf16.msra.mxu0 %v724
        %759 = vmatpush.bf16.msra.mxu0 %v723
        %760 = vmatpush.bf16.msra.mxu0 %v722
        %761 = vmatpush.bf16.msra.mxu0 %v721
        %762 = vmatpush.bf16.msra.mxu0 %v720
        %763 = vmatpush.bf16.msra.mxu0 %v719
        %764 = vmatmul.bf16.gmra.mxu0 %v610
        %v765 = vpop.f32.mrf.mxu0
        %v766 = vadd.f32 %v753, %v765
        %v767 = vpop.f32.mrf.mxu0
        %768 = vdwg.mxu0
        loop: start=0, step=1, limit=8
        $region100: #{tpu_custom_call.1} parent=67 // loop_pre_header
          _
        $region101: #{tpu_custom_call.1} parent=67 // loop_header
          %s770 = sphi 0, %s774
          %p771 = scmp.ge.s32.totalorder %s770, 8
        $region102: #{tpu_custom_call.1} parent=67 // loop_header_branch
          %773 = sbr.rel (%p771) target = $region106
        $region103: #{tpu_custom_call.1} parent=67 // loop_body
          %s775 = smul.u32 1, 1
          %s776 = sshll.u32 %s775, 4
          %777 = dma.done [#allocation3], %s776
          %s778 = scalar_lea.sflag [#allocation3], 1
          %s779 = sshll.u32 %s775, 4
          %780 = dma.done %s778, %s779
        $region104: #{tpu_custom_call.1} parent=67 // loop_footer
          %s774 = sadd.s32 1, %s770
        $region105: #{tpu_custom_call.1} parent=67 // loop_footer_branch
          %769 = sbr.rel target = $region101
        $region106: #{tpu_custom_call.1} parent=67 // loop_exit
          _
        %v781 = vld [vmem:[#allocation2] sm:$0xff]
        %v782 = vld [vmem:[#allocation2 + $0x8] sm:$0xff]
        %v783 = vpack.c.bf16 %v781, %v781
        %v784 = vpack.c.bf16 %v782, %v782
        %v785 = vld [vmem:[#allocation10] sm:$0xff]
        %v786 = vld [vmem:[#allocation10 + $0x8] sm:$0xff]
        %v787 = vld [vmem:[#allocation10 + $0x10] sm:$0xff]
        %v788 = vld [vmem:[#allocation10 + $0x18] sm:$0xff]
        %v789 = vld [vmem:[#allocation10 + $0x20] sm:$0xff]
        %v790 = vld [vmem:[#allocation10 + $0x28] sm:$0xff]
        %v791 = vld [vmem:[#allocation10 + $0x30] sm:$0xff]
        %v792 = vld [vmem:[#allocation10 + $0x38] sm:$0xff]
        %v793 = vld [vmem:[#allocation10 + $0x40] sm:$0xff]
        %v794 = vld [vmem:[#allocation10 + $0x48] sm:$0xff]
        %v795 = vld [vmem:[#allocation10 + $0x50] sm:$0xff]
        %v796 = vld [vmem:[#allocation10 + $0x58] sm:$0xff]
        %v797 = vld [vmem:[#allocation10 + $0x60] sm:$0xff]
        %v798 = vld [vmem:[#allocation10 + $0x68] sm:$0xff]
        %v799 = vld [vmem:[#allocation10 + $0x70] sm:$0xff]
        %v800 = vld [vmem:[#allocation10 + $0x78] sm:$0xff]
        %v801 = vld [vmem:[#allocation10 + $0x80] sm:$0xff]
        %v802 = vld [vmem:[#allocation10 + $0x88] sm:$0xff]
        %v803 = vld [vmem:[#allocation10 + $0x90] sm:$0xff]
        %v804 = vld [vmem:[#allocation10 + $0x98] sm:$0xff]
        %v805 = vld [vmem:[#allocation10 + $0xa0] sm:$0xff]
        %v806 = vld [vmem:[#allocation10 + $0xa8] sm:$0xff]
        %v807 = vld [vmem:[#allocation10 + $0xb0] sm:$0xff]
        %v808 = vld [vmem:[#allocation10 + $0xb8] sm:$0xff]
        %v809 = vld [vmem:[#allocation10 + $0xc0] sm:$0xff]
        %v810 = vld [vmem:[#allocation10 + $0xc8] sm:$0xff]
        %v811 = vld [vmem:[#allocation10 + $0xd0] sm:$0xff]
        %v812 = vld [vmem:[#allocation10 + $0xd8] sm:$0xff]
        %v813 = vld [vmem:[#allocation10 + $0xe0] sm:$0xff]
        %v814 = vld [vmem:[#allocation10 + $0xe8] sm:$0xff]
        %v815 = vld [vmem:[#allocation10 + $0xf0] sm:$0xff]
        %v816 = vld [vmem:[#allocation10 + $0xf8] sm:$0xff]
        %v817 = vpack.c.bf16 %v766, %v766
        %v818 = vld [vmem:[#allocation12] sm:$0xff]
        %v819 = vld [vmem:[#allocation12 + $0x8] sm:$0xff]
        %v820 = vld [vmem:[#allocation12 + $0x10] sm:$0xff]
        %v821 = vld [vmem:[#allocation12 + $0x18] sm:$0xff]
        %v822 = vld [vmem:[#allocation12 + $0x20] sm:$0xff]
        %v823 = vld [vmem:[#allocation12 + $0x28] sm:$0xff]
        %v824 = vld [vmem:[#allocation12 + $0x30] sm:$0xff]
        %v825 = vld [vmem:[#allocation12 + $0x38] sm:$0xff]
        %v826 = vld [vmem:[#allocation12 + $0x40] sm:$0xff]
        %v827 = vld [vmem:[#allocation12 + $0x48] sm:$0xff]
        %v828 = vld [vmem:[#allocation12 + $0x50] sm:$0xff]
        %v829 = vld [vmem:[#allocation12 + $0x58] sm:$0xff]
        %v830 = vld [vmem:[#allocation12 + $0x60] sm:$0xff]
        %v831 = vld [vmem:[#allocation12 + $0x68] sm:$0xff]
        %v832 = vld [vmem:[#allocation12 + $0x70] sm:$0xff]
        %v833 = vld [vmem:[#allocation12 + $0x78] sm:$0xff]
        %v850 = vunpack.c.l.b16 %v818
        %v851 = vunpack.c.h.b16 %v818
        %v852 = vunpack.c.l.b16 %v819
        %v853 = vunpack.c.h.b16 %v819
        %v854 = vunpack.c.l.b16 %v820
        %v855 = vunpack.c.h.b16 %v820
        %v856 = vunpack.c.l.b16 %v821
        %v857 = vunpack.c.h.b16 %v821
        %v858 = vunpack.c.l.b16 %v822
        %v859 = vunpack.c.h.b16 %v822
        %v860 = vunpack.c.l.b16 %v823
        %v861 = vunpack.c.h.b16 %v823
        %v862 = vunpack.c.l.b16 %v824
        %v863 = vunpack.c.h.b16 %v824
        %v864 = vunpack.c.l.b16 %v825
        %v865 = vunpack.c.h.b16 %v825
        %v866 = vunpack.c.l.b16 %v826
        %v867 = vunpack.c.h.b16 %v826
        %v868 = vunpack.c.l.b16 %v827
        %v869 = vunpack.c.h.b16 %v827
        %v870 = vunpack.c.l.b16 %v828
        %v871 = vunpack.c.h.b16 %v828
        %v872 = vunpack.c.l.b16 %v829
        %v873 = vunpack.c.h.b16 %v829
        %v874 = vunpack.c.l.b16 %v830
        %v875 = vunpack.c.h.b16 %v830
        %v876 = vunpack.c.l.b16 %v831
        %v877 = vunpack.c.h.b16 %v831
        %v878 = vunpack.c.l.b16 %v832
        %v879 = vunpack.c.h.b16 %v832
        %v880 = vunpack.c.l.b16 %v833
        %v881 = vunpack.c.h.b16 %v833
        %v882 = vpack.c.b16 %v852, %v850
        %v883 = vpack.c.b16 %v853, %v851
        %v884 = vpack.c.b16 %v856, %v854
        %v885 = vpack.c.b16 %v857, %v855
        %v886 = vpack.c.b16 %v860, %v858
        %v887 = vpack.c.b16 %v861, %v859
        %v888 = vpack.c.b16 %v864, %v862
        %v889 = vpack.c.b16 %v865, %v863
        %v890 = vpack.c.b16 %v868, %v866
        %v891 = vpack.c.b16 %v869, %v867
        %v892 = vpack.c.b16 %v872, %v870
        %v893 = vpack.c.b16 %v873, %v871
        %v894 = vpack.c.b16 %v876, %v874
        %v895 = vpack.c.b16 %v877, %v875
        %v896 = vpack.c.b16 %v880, %v878
        %v897 = vpack.c.b16 %v881, %v879
        %914 = vmatpush.bf16.msra.mxu0 %v896
        %915 = vmatpush.bf16.msra.mxu0 %v894
        %916 = vmatpush.bf16.msra.mxu0 %v892
        %917 = vmatpush.bf16.msra.mxu0 %v890
        %918 = vmatpush.bf16.msra.mxu0 %v888
        %919 = vmatpush.bf16.msra.mxu0 %v886
        %920 = vmatpush.bf16.msra.mxu0 %v884
        %921 = vmatpush.bf16.msra.mxu0 %v882
        %922 = vmatmul.bf16.gmra.mxu0 %v817
        %v923 = vpop.f32.mrf.mxu0
        %v924 = vadd.f32 0.0, %v923
        %v925 = vpop.f32.mrf.mxu0
        %926 = vdwg.mxu0
        %927 = vmatpush.bf16.msra.mxu0 %v897
        %928 = vmatpush.bf16.msra.mxu0 %v895
        %929 = vmatpush.bf16.msra.mxu0 %v893
        %930 = vmatpush.bf16.msra.mxu0 %v891
        %931 = vmatpush.bf16.msra.mxu0 %v889
        %932 = vmatpush.bf16.msra.mxu0 %v887
        %933 = vmatpush.bf16.msra.mxu0 %v885
        %934 = vmatpush.bf16.msra.mxu0 %v883
        %935 = vmatmul.bf16.gmra.mxu0 %v817
        %v936 = vpop.f32.mrf.mxu0
        %v937 = vadd.f32 0.0, %v936
        %v938 = vpop.f32.mrf.mxu0
        %939 = vdwg.mxu0
        %v972 = vunpack.c.l.b16 %v785
        %v973 = vunpack.c.h.b16 %v785
        %v974 = vunpack.c.l.b16 %v786
        %v975 = vunpack.c.h.b16 %v786
        %v976 = vunpack.c.l.b16 %v787
        %v977 = vunpack.c.h.b16 %v787
        %v978 = vunpack.c.l.b16 %v788
        %v979 = vunpack.c.h.b16 %v788
        %v980 = vunpack.c.l.b16 %v789
        %v981 = vunpack.c.h.b16 %v789
        %v982 = vunpack.c.l.b16 %v790
        %v983 = vunpack.c.h.b16 %v790
        %v984 = vunpack.c.l.b16 %v791
        %v985 = vunpack.c.h.b16 %v791
        %v986 = vunpack.c.l.b16 %v792
        %v987 = vunpack.c.h.b16 %v792
        %v988 = vunpack.c.l.b16 %v793
        %v989 = vunpack.c.h.b16 %v793
        %v990 = vunpack.c.l.b16 %v794
        %v991 = vunpack.c.h.b16 %v794
        %v992 = vunpack.c.l.b16 %v795
        %v993 = vunpack.c.h.b16 %v795
        %v994 = vunpack.c.l.b16 %v796
        %v995 = vunpack.c.h.b16 %v796
        %v996 = vunpack.c.l.b16 %v797
        %v997 = vunpack.c.h.b16 %v797
        %v998 = vunpack.c.l.b16 %v798
        %v999 = vunpack.c.h.b16 %v798
        %v1000 = vunpack.c.l.b16 %v799
        %v1001 = vunpack.c.h.b16 %v799
        %v1002 = vunpack.c.l.b16 %v800
        %v1003 = vunpack.c.h.b16 %v800
        %v1004 = vunpack.c.l.b16 %v801
        %v1005 = vunpack.c.h.b16 %v801
        %v1006 = vunpack.c.l.b16 %v802
        %v1007 = vunpack.c.h.b16 %v802
        %v1008 = vunpack.c.l.b16 %v803
        %v1009 = vunpack.c.h.b16 %v803
        %v1010 = vunpack.c.l.b16 %v804
        %v1011 = vunpack.c.h.b16 %v804
        %v1012 = vunpack.c.l.b16 %v805
        %v1013 = vunpack.c.h.b16 %v805
        %v1014 = vunpack.c.l.b16 %v806
        %v1015 = vunpack.c.h.b16 %v806
        %v1016 = vunpack.c.l.b16 %v807
        %v1017 = vunpack.c.h.b16 %v807
        %v1018 = vunpack.c.l.b16 %v808
        %v1019 = vunpack.c.h.b16 %v808
        %v1020 = vunpack.c.l.b16 %v809
        %v1021 = vunpack.c.h.b16 %v809
        %v1022 = vunpack.c.l.b16 %v810
        %v1023 = vunpack.c.h.b16 %v810
        %v1024 = vunpack.c.l.b16 %v811
        %v1025 = vunpack.c.h.b16 %v811
        %v1026 = vunpack.c.l.b16 %v812
        %v1027 = vunpack.c.h.b16 %v812
        %v1028 = vunpack.c.l.b16 %v813
        %v1029 = vunpack.c.h.b16 %v813
        %v1030 = vunpack.c.l.b16 %v814
        %v1031 = vunpack.c.h.b16 %v814
        %v1032 = vunpack.c.l.b16 %v815
        %v1033 = vunpack.c.h.b16 %v815
        %v1034 = vunpack.c.l.b16 %v816
        %v1035 = vunpack.c.h.b16 %v816
        %v1036 = vpack.c.b16 %v974, %v972
        %v1037 = vpack.c.b16 %v975, %v973
        %v1038 = vpack.c.b16 %v978, %v976
        %v1039 = vpack.c.b16 %v979, %v977
        %v1040 = vpack.c.b16 %v982, %v980
        %v1041 = vpack.c.b16 %v983, %v981
        %v1042 = vpack.c.b16 %v986, %v984
        %v1043 = vpack.c.b16 %v987, %v985
        %v1044 = vpack.c.b16 %v990, %v988
        %v1045 = vpack.c.b16 %v991, %v989
        %v1046 = vpack.c.b16 %v994, %v992
        %v1047 = vpack.c.b16 %v995, %v993
        %v1048 = vpack.c.b16 %v998, %v996
        %v1049 = vpack.c.b16 %v999, %v997
        %v1050 = vpack.c.b16 %v1002, %v1000
        %v1051 = vpack.c.b16 %v1003, %v1001
        %v1052 = vpack.c.b16 %v1006, %v1004
        %v1053 = vpack.c.b16 %v1007, %v1005
        %v1054 = vpack.c.b16 %v1010, %v1008
        %v1055 = vpack.c.b16 %v1011, %v1009
        %v1056 = vpack.c.b16 %v1014, %v1012
        %v1057 = vpack.c.b16 %v1015, %v1013
        %v1058 = vpack.c.b16 %v1018, %v1016
        %v1059 = vpack.c.b16 %v1019, %v1017
        %v1060 = vpack.c.b16 %v1022, %v1020
        %v1061 = vpack.c.b16 %v1023, %v1021
        %v1062 = vpack.c.b16 %v1026, %v1024
        %v1063 = vpack.c.b16 %v1027, %v1025
        %v1064 = vpack.c.b16 %v1030, %v1028
        %v1065 = vpack.c.b16 %v1031, %v1029
        %v1066 = vpack.c.b16 %v1034, %v1032
        %v1067 = vpack.c.b16 %v1035, %v1033
        %1100 = vmatpush.bf16.msra.mxu0 %v1050
        %1101 = vmatpush.bf16.msra.mxu0 %v1048
        %1102 = vmatpush.bf16.msra.mxu0 %v1046
        %1103 = vmatpush.bf16.msra.mxu0 %v1044
        %1104 = vmatpush.bf16.msra.mxu0 %v1042
        %1105 = vmatpush.bf16.msra.mxu0 %v1040
        %1106 = vmatpush.bf16.msra.mxu0 %v1038
        %1107 = vmatpush.bf16.msra.mxu0 %v1036
        %1108 = vmatmul.bf16.gmra.mxu0 %v783
        %v1109 = vpop.f32.mrf.mxu0
        %v1110 = vadd.f32 %v924, %v1109
        %v1111 = vpop.f32.mrf.mxu0
        %1112 = vdwg.mxu0
        %1113 = vmatpush.bf16.msra.mxu0 %v1066
        %1114 = vmatpush.bf16.msra.mxu0 %v1064
        %1115 = vmatpush.bf16.msra.mxu0 %v1062
        %1116 = vmatpush.bf16.msra.mxu0 %v1060
        %1117 = vmatpush.bf16.msra.mxu0 %v1058
        %1118 = vmatpush.bf16.msra.mxu0 %v1056
        %1119 = vmatpush.bf16.msra.mxu0 %v1054
        %1120 = vmatpush.bf16.msra.mxu0 %v1052
        %1121 = vmatmul.bf16.gmra.mxu0 %v784
        %v1122 = vpop.f32.mrf.mxu0
        %v1123 = vadd.f32 %v1110, %v1122
        %v1124 = vpop.f32.mrf.mxu0
        %1125 = vdwg.mxu0
        %1126 = vmatpush.bf16.msra.mxu0 %v1051
        %1127 = vmatpush.bf16.msra.mxu0 %v1049
        %1128 = vmatpush.bf16.msra.mxu0 %v1047
        %1129 = vmatpush.bf16.msra.mxu0 %v1045
        %1130 = vmatpush.bf16.msra.mxu0 %v1043
        %1131 = vmatpush.bf16.msra.mxu0 %v1041
        %1132 = vmatpush.bf16.msra.mxu0 %v1039
        %1133 = vmatpush.bf16.msra.mxu0 %v1037
        %1134 = vmatmul.bf16.gmra.mxu0 %v783
        %v1135 = vpop.f32.mrf.mxu0
        %v1136 = vadd.f32 %v937, %v1135
        %v1137 = vpop.f32.mrf.mxu0
        %1138 = vdwg.mxu0
        %1139 = vmatpush.bf16.msra.mxu0 %v1067
        %1140 = vmatpush.bf16.msra.mxu0 %v1065
        %1141 = vmatpush.bf16.msra.mxu0 %v1063
        %1142 = vmatpush.bf16.msra.mxu0 %v1061
        %1143 = vmatpush.bf16.msra.mxu0 %v1059
        %1144 = vmatpush.bf16.msra.mxu0 %v1057
        %1145 = vmatpush.bf16.msra.mxu0 %v1055
        %1146 = vmatpush.bf16.msra.mxu0 %v1053
        %1147 = vmatmul.bf16.gmra.mxu0 %v784
        %v1148 = vpop.f32.mrf.mxu0
        %v1149 = vadd.f32 %v1136, %v1148
        %v1150 = vpop.f32.mrf.mxu0
        %1151 = vdwg.mxu0
        %v1152 = vld [vmem:[%s11] sm:$0x3]
        %v1154 = vperm.slane %v1152, 0
        %v1155 = vperm.slane %v1152, 1
        %v1158 = vadd.f32 %v1123, %v1154
        %v1159 = vadd.f32 %v1149, %v1155
        %v1160 = vmax.f32 %v1158, 0.0
        %v1161 = vmax.f32 %v1159, 0.0
        %v1162 = vpack.c.bf16 %v1160, %v1160
        %v1163 = vpack.c.bf16 %v1161, %v1161
        %v1164 = vld [vmem:[#allocation13] sm:$0xf]
        %v1165 = vld [vmem:[#allocation13 + $0x4] sm:$0xf]
        %v1166 = vld [vmem:[#allocation13 + $0x8] sm:$0xf]
        %v1167 = vld [vmem:[#allocation13 + $0xc] sm:$0xf]
        %v1168 = vld [vmem:[#allocation13 + $0x10] sm:$0xf]
        %v1169 = vld [vmem:[#allocation13 + $0x14] sm:$0xf]
        %v1170 = vld [vmem:[#allocation13 + $0x18] sm:$0xf]
        %v1171 = vld [vmem:[#allocation13 + $0x1c] sm:$0xf]
        %v1172 = vld [vmem:[#allocation13 + $0x20] sm:$0xf]
        %v1173 = vld [vmem:[#allocation13 + $0x24] sm:$0xf]
        %v1174 = vld [vmem:[#allocation13 + $0x28] sm:$0xf]
        %v1175 = vld [vmem:[#allocation13 + $0x2c] sm:$0xf]
        %v1176 = vld [vmem:[#allocation13 + $0x30] sm:$0xf]
        %v1177 = vld [vmem:[#allocation13 + $0x34] sm:$0xf]
        %v1178 = vld [vmem:[#allocation13 + $0x38] sm:$0xf]
        %v1179 = vld [vmem:[#allocation13 + $0x3c] sm:$0xf]
        %v1180 = vld [vmem:[#allocation13 + $0x40] sm:$0xf]
        %v1181 = vld [vmem:[#allocation13 + $0x44] sm:$0xf]
        %v1182 = vld [vmem:[#allocation13 + $0x48] sm:$0xf]
        %v1183 = vld [vmem:[#allocation13 + $0x4c] sm:$0xf]
        %v1184 = vld [vmem:[#allocation13 + $0x50] sm:$0xf]
        %v1185 = vld [vmem:[#allocation13 + $0x54] sm:$0xf]
        %v1186 = vld [vmem:[#allocation13 + $0x58] sm:$0xf]
        %v1187 = vld [vmem:[#allocation13 + $0x5c] sm:$0xf]
        %v1188 = vld [vmem:[#allocation13 + $0x60] sm:$0xf]
        %v1189 = vld [vmem:[#allocation13 + $0x64] sm:$0xf]
        %v1190 = vld [vmem:[#allocation13 + $0x68] sm:$0xf]
        %v1191 = vld [vmem:[#allocation13 + $0x6c] sm:$0xf]
        %v1192 = vld [vmem:[#allocation13 + $0x70] sm:$0xf]
        %v1193 = vld [vmem:[#allocation13 + $0x74] sm:$0xf]
        %v1194 = vld [vmem:[#allocation13 + $0x78] sm:$0xf]
        %v1195 = vld [vmem:[#allocation13 + $0x7c] sm:$0xf]
        %v1196 = vld [vmem:[%s13] sm:$0x1]
        %v1198 = vperm.slane %v1196, 0
        %v1232 = vunpack.c.l.b16 %v1164
        %v1233 = vunpack.c.l.b16 %v1165
        %v1234 = vunpack.c.l.b16 %v1166
        %v1235 = vunpack.c.l.b16 %v1167
        %v1236 = vunpack.c.l.b16 %v1168
        %v1237 = vunpack.c.l.b16 %v1169
        %v1238 = vunpack.c.l.b16 %v1170
        %v1239 = vunpack.c.l.b16 %v1171
        %v1240 = vunpack.c.l.b16 %v1172
        %v1241 = vunpack.c.l.b16 %v1173
        %v1242 = vunpack.c.l.b16 %v1174
        %v1243 = vunpack.c.l.b16 %v1175
        %v1244 = vunpack.c.l.b16 %v1176
        %v1245 = vunpack.c.l.b16 %v1177
        %v1246 = vunpack.c.l.b16 %v1178
        %v1247 = vunpack.c.l.b16 %v1179
        %v1248 = vunpack.c.l.b16 %v1180
        %v1249 = vunpack.c.l.b16 %v1181
        %v1250 = vunpack.c.l.b16 %v1182
        %v1251 = vunpack.c.l.b16 %v1183
        %v1252 = vunpack.c.l.b16 %v1184
        %v1253 = vunpack.c.l.b16 %v1185
        %v1254 = vunpack.c.l.b16 %v1186
        %v1255 = vunpack.c.l.b16 %v1187
        %v1256 = vunpack.c.l.b16 %v1188
        %v1257 = vunpack.c.l.b16 %v1189
        %v1258 = vunpack.c.l.b16 %v1190
        %v1259 = vunpack.c.l.b16 %v1191
        %v1260 = vunpack.c.l.b16 %v1192
        %v1261 = vunpack.c.l.b16 %v1193
        %v1262 = vunpack.c.l.b16 %v1194
        %v1263 = vunpack.c.l.b16 %v1195
        %v1264 = vpack.c.b16 %v1233, %v1232
        %v1265 = vpack.c.b16 %v1235, %v1234
        %v1266 = vpack.c.b16 %v1237, %v1236
        %v1267 = vpack.c.b16 %v1239, %v1238
        %v1268 = vpack.c.b16 %v1241, %v1240
        %v1269 = vpack.c.b16 %v1243, %v1242
        %v1270 = vpack.c.b16 %v1245, %v1244
        %v1271 = vpack.c.b16 %v1247, %v1246
        %v1272 = vpack.c.b16 %v1249, %v1248
        %v1273 = vpack.c.b16 %v1251, %v1250
        %v1274 = vpack.c.b16 %v1253, %v1252
        %v1275 = vpack.c.b16 %v1255, %v1254
        %v1276 = vpack.c.b16 %v1257, %v1256
        %v1277 = vpack.c.b16 %v1259, %v1258
        %v1278 = vpack.c.b16 %v1261, %v1260
        %v1279 = vpack.c.b16 %v1263, %v1262
        %1296 = vmatpush.bf16.msra.mxu0 %v1271
        %1297 = vmatpush.bf16.msra.mxu0 %v1270
        %1298 = vmatpush.bf16.msra.mxu0 %v1269
        %1299 = vmatpush.bf16.msra.mxu0 %v1268
        %1300 = vmatpush.bf16.msra.mxu0 %v1267
        %1301 = vmatpush.bf16.msra.mxu0 %v1266
        %1302 = vmatpush.bf16.msra.mxu0 %v1265
        %1303 = vmatpush.bf16.msra.mxu0 %v1264
        %1304 = vmatmul.bf16.gmra.mxu0 %v1162
        %v1305 = vpop.f32.mrf.mxu0
        %v1306 = vadd.f32 %v1198, %v1305
        %v1307 = vpop.f32.mrf.mxu0
        %1308 = vdwg.mxu0
        %1309 = vmatpush.bf16.msra.mxu0 %v1279
        %1310 = vmatpush.bf16.msra.mxu0 %v1278
        %1311 = vmatpush.bf16.msra.mxu0 %v1277
        %1312 = vmatpush.bf16.msra.mxu0 %v1276
        %1313 = vmatpush.bf16.msra.mxu0 %v1275
        %1314 = vmatpush.bf16.msra.mxu0 %v1274
        %1315 = vmatpush.bf16.msra.mxu0 %v1273
        %1316 = vmatpush.bf16.msra.mxu0 %v1272
        %1317 = vmatmul.bf16.gmra.mxu0 %v1163
        %v1318 = vpop.f32.mrf.mxu0
        %v1319 = vadd.f32 %v1306, %v1318
        %v1320 = vpop.f32.mrf.mxu0
        %1321 = vdwg.mxu0
        %v1322 = vmax.f32 %v1319, 0.0
        %v1323 = vld [vmem:[%s14] sm:$0x1]
        %v1325 = vperm.slane %v1323, 0
        %v1327 = vmul.f32 %v1322, %v1325
        %1328 = vadd.xlane.f32.xlu0 %v1327
        %v1329 = vpop.xlane.xlu0 %1328
        %v1330 = vld [vmem:[#allocation7] sm:$0x1]
        %v1332 = vperm.slane %v1330, 0
        %v1334 = vadd.f32 %v1329, %v1332
        %v1335 = vxor.u32 %v1334, 2147483648
        %v1336 = vmul.f32 %v1335, 1.442695
        %v1337 = vpow.pop %v1336
        %v1338 = vadd.f32 %v1337, 1.0
        %v1339 = vrcp.pop %v1338
        %v1340 = vmul.f32 %v1338, %v1339
        %v1341 = vsub.f32 1.0, %v1340
        %v1342 = vmul.f32 %v1339, %v1341
        %v1343 = vadd.f32 %v1339, %v1342
        %vm1344 = vweird.f32 %v1338
        %vm1345 = vweird.f32 %v1339
        %vm1346 = vmor %vm1344, %vm1345
        %v1347 = vsel %vm1346, %v1339, %v1343
        %v1348 = vand.u32 2147483647, %v1338
        %vm1349 = vcmp.eq.f32.partialorder %v1348, 8.507059e+37
        %v1350 = vand.u32 %v1338, 2147483648
        %v1351 = vor.u32 1.1754944e-38, %v1350
        %v1352 = vsel %vm1349, %v1351, %v1347
        %v1353 = vmul.f32 1.0, %v1352
        %v1354 = vmul.f32 %v1353, 4.0
        %v1355 = vadd.f32 %v1354, 1.0
        %vm1356 = vcmask 7168
        %1357 = vst.msk [vmem:[%s494] sm:$0xff] %vm1356, %v1355
        %p1358 = scmp.lt.s32.totalorder %s45, 2
        %s1359 = scalar_select %p1358, %s45, 2
        %s1360 = smul.addr %s1359, 8
        %s1361 = scalar_lea.vmem %s16, %s1360
        // Predicated region
        $region107: #{tpu_custom_call.1} parent=67 // pred_check
          %p1362 = pneg %p320
        $region108: #{tpu_custom_call.1} parent=67 // pred_check_branch
          %1364 = sbr.rel (%p1362) target = $region110
        $region109: #{tpu_custom_call.1} parent=67 // pred_region
          _
        $region110: #{tpu_custom_call.1} parent=67 // pred_fallthru
          _
      $region68: #{tpu_custom_call.1} parent=5 // pred_fallthru
        _
      %p1365 = scmp.le.s32.totalorder 2, %s40
      // Predicated region
      $region111: #{tpu_custom_call.1} parent=5 // pred_check
        %p1366 = pneg %p1365
      $region112: #{tpu_custom_call.1} parent=5 // pred_check_branch
        %1368 = sbr.rel (%p1366) target = $region114
      $region113: #{tpu_custom_call.1} parent=5 // pred_region
        %s1369 = ssub.s32 %s40, 2
        // Predicated region
        $region115: #{tpu_custom_call.1} parent=113 // pred_check
          %p1370 = pneg %p326
        $region116: #{tpu_custom_call.1} parent=113 // pred_check_branch
          %1372 = sbr.rel (%p1370) target = $region118
        $region117: #{tpu_custom_call.1} parent=113 // pred_region
          %p1373 = scmp.lt.s32.totalorder %s46, 2
          %s1374 = scalar_select %p1373, %s46, 2
          %s1375 = smul.addr %s1374, 8
          %s1376 = scalar_lea.vmem %s16, %s1375
        $region118: #{tpu_custom_call.1} parent=113 // pred_fallthru
          _
      $region114: #{tpu_custom_call.1} parent=5 // pred_fallthru
        _
    $region6: #{tpu_custom_call.1} parent=1 // loop_footer
      %s44 = sadd.s32 1, %s40
    $region7: #{tpu_custom_call.1} parent=1 // loop_footer_branch
      %39 = sbr.rel target = $region3
    $region8: #{tpu_custom_call.1} parent=1 // loop_exit
      _
    %1377 = vsyncpa [#allocation9], 1
    %s1378 = scalar_lea.sflag [#allocation9], 1
    %1379 = vsyncpa %s1378, 1
    %1380 = vsyncpa [#allocation11], 1
    %1381 = vsyncpa [#allocation14], 1
  %1382 = vsyncmov [#allocation3]
  %s1383 = vpop.sfrf %1382
  %p1384 = scmp.eq.s32.totalorder %s1383, 0
  %p1385 = pneg %p1384
  %1387 = shalt.err (%p1385)
  %s1388 = scalar_lea.sflag [#allocation3], 1
  %1389 = vsyncmov %s1388
  %s1390 = vpop.sfrf %1389
  %p1391 = scmp.eq.s32.totalorder %s1390, 0
  %p1392 = pneg %p1391
  %1394 = shalt.err (%p1392)

</llo_original>
